<compile_context>
chip_gen: v7x
topology: tpu7x:2x2x1
jax: 0.10.0
libtpu: 0.0.40
codegen_flags: <defaults>
</compile_context>

<pallas_src>
import functools
import math

import jax
import jax.numpy as jnp
from jax import lax
from jax.experimental import pallas as pl
from jax.experimental.pallas import tpu as pltpu


def _cdiv(a, b):
    return -(-a // b)


def _round_up(a, b):
    return _cdiv(a, b) * b


def _pad_gate_cols(m, HS, HSP):
    """(..., 4*HS) -> (..., 4*HSP): each gate block zero-padded to HSP columns."""
    lead = m.shape[:-1]
    m4 = m.reshape(lead + (4, HS))
    m4 = jnp.pad(m4, [(0, 0)] * len(lead) + [(0, 0), (0, HSP - HS)])
    return m4.reshape(lead + (4 * HSP,))


def _tensorcores_per_chip():
    """2 on v7x (megacore batch-shard win), 1 on v5e/v6e. Fallback: 1."""
    try:
        kind = jax.devices()[0].device_kind.lower()
    except Exception:
        return 1
    return 2 if "v7" in kind else 1


def _vmem_capacity_bytes():
    try:
        return int(pltpu.get_tpu_info().vmem_capacity_bytes)
    except Exception:
        return 64 * 1024 * 1024  # conservative: v7x physical VMEM


def _vmem_usage_bytes(t_blk, bs_blk, in_sz, HSP, x_item, w_item, out_item, wbuf):
    b = 0
    b += 2 * t_blk * bs_blk * in_sz * x_item      # x block (double-buffered)
    b += wbuf * in_sz * 4 * HSP * w_item          # W (resident)
    b += wbuf * HSP * 4 * HSP * w_item            # U (resident)
    b += wbuf * 4 * HSP * 4                       # bias (f32)
    b += 2 * t_blk * bs_blk * HSP * out_item      # hidden_seq block (double-buffered)
    b += 2 * bs_blk * HSP * out_item              # c_T block
    b += 2 * bs_blk * HSP * 4                     # h / c scratch (f32)
    b += 2 * t_blk * bs_blk * 4 * HSP * 4         # xw scratch + transient matmul result
    return b


def _lstm_kernel(x_ref, w_ref, u_ref, b_ref, hseq_ref, clast_ref,
                 xw_scr, h_scr, c_scr, *, HSP, T_BLK, seq, mm_dtype):
    tb = pl.program_id(1)          # time-block index (inner, sequential axis)

    # h_0 = c_0 = 0 (module's default init_states path), per batch shard.
    @pl.when(tb == 0)
    def _():
        h_scr[...] = jnp.zeros_like(h_scr)
        c_scr[...] = jnp.zeros_like(c_scr)

    t_blk, bs_blk, in_sz = x_ref.shape

    # ---- Hoisted input projection: one big MXU matmul per time block ----
    # (T_BLK*bs, in) @ (in, 4*HSP) + bias  -- off the serial critical path.
    x2 = x_ref[...].reshape(t_blk * bs_blk, in_sz).astype(mm_dtype)
    xw = jnp.dot(x2, w_ref[...], preferred_element_type=jnp.float32) + b_ref[...]
    xw_scr[...] = xw.reshape(t_blk, bs_blk, 4 * HSP)

    def sigmoid(v):                # single EUP push (vs exp + reciprocal)
        return 0.5 * jnp.tanh(0.5 * v) + 0.5

    u = u_ref[...]                 # resident recurrent weights (mm_dtype)

    def step(t, carry):
        h, c = carry
        gates = xw_scr[t] + jnp.dot(h.astype(mm_dtype), u,
                                    preferred_element_type=jnp.float32)
        # Lane-aligned gate slices (HSP is a multiple of 128): free views.
        i_t = sigmoid(gates[:, 0 * HSP:1 * HSP])
        f_t = sigmoid(gates[:, 1 * HSP:2 * HSP])
        g_t = jnp.tanh(gates[:, 2 * HSP:3 * HSP])
        o_t = sigmoid(gates[:, 3 * HSP:4 * HSP])
        c_new = f_t * c + i_t * g_t
        h_new = o_t * jnp.tanh(c_new)
        hseq_ref[t] = h_new.astype(hseq_ref.dtype)   # full-tile, lane-dense store

        # Capture c_T exactly at the last *valid* timestep: no per-step tail
        # selects needed (padded timesteps/rows are cropped in the wrapper).
        @pl.when(tb * T_BLK + t == seq - 1)
        def _():
            clast_ref[...] = c_new.astype(clast_ref.dtype)

        return h_new, c_new

    # Partially-unrolled serial recurrence: bounds vreg live ranges while
    # keeping LLO scheduler visibility.
    h, c = lax.fori_loop(0, T_BLK, step, (h_scr[...], c_scr[...]),
                         unroll=min(8, T_BLK))
    h_scr[...] = h
    c_scr[...] = c


def cl_lstm_forward(x, W, U, bias, *, matmul_dtype=jnp.float32):
    """x: (batch, seq, input) float32. Returns (hidden_seq, (h_T, c_T)).

    matmul_dtype=jnp.bfloat16 runs both MXU matmuls with bf16 operands
    (weights stored bf16); h/c state, gate math and outputs stay float32.
    """
    bs, seq, in_sz = x.shape
    HS = U.shape[0]
    assert W.shape == (in_sz, 4 * HS)
    assert bias.shape == (4 * HS,)

    HSP = _round_up(HS, 128)          # lane-aligned gate width
    bs_pad = _round_up(bs, 8)         # sublane quantum

    # Batch-shard only on 2-TensorCore parts (v7x megacore). On single-TC
    # v5e/v6e an extra "parallel" axis is just a serial outer loop: it would
    # re-run the hoisted X@W and halve the h@U matmul M dimension.
    n_tc = _tensorcores_per_chip()
    n_bshard = n_tc if (n_tc > 1 and bs_pad % (8 * n_tc) == 0) else 1
    bs_blk = bs_pad // n_bshard

    x_item = jnp.dtype(x.dtype).itemsize
    w_item = jnp.dtype(matmul_dtype).itemsize
    out_item = jnp.dtype(x.dtype).itemsize

    # Single-buffer resident weights (constant index_map, never re-fetched)
    # once they are big enough to matter.
    weights_bytes = (in_sz * 4 * HSP + HSP * 4 * HSP) * w_item
    single_buffer_weights = weights_bytes >= (2 << 20)
    wbuf = 1 if single_buffer_weights else 2

    # Size the time block against the device's physical VMEM (64 MiB on v7x,
    # 128 MiB on v5e/v6e) and set an explicit scoped-VMEM limit.
    vmem_cap = _vmem_capacity_bytes()
    budget = int(0.6 * vmem_cap)
    t_cands = [c for c in (8, 16, 32, 64, 128) if c <= seq] or [seq]
    T_BLK = t_cands[0]
    for c in t_cands:
        if _vmem_usage_bytes(c, bs_blk, in_sz, HSP,
                             x_item, w_item, out_item, wbuf) <= budget:
            T_BLK = c
    seq_pad = T_BLK * _cdiv(seq, T_BLK)
    n_tblk = seq_pad // T_BLK

    usage = _vmem_usage_bytes(T_BLK, bs_blk, in_sz, HSP,
                              x_item, w_item, out_item, wbuf)
    vmem_limit = int(min(0.9 * vmem_cap, max(32 << 20, int(1.4 * usage))))

    # Gate-aligned (128-lane) weight/bias layout, zero-padded (exact zeros keep
    # the padded hidden columns at 0 and out of the real computation).
    W_p = _pad_gate_cols(W, HS, HSP).astype(matmul_dtype)                # (in, 4*HSP)
    U_p = jnp.pad(_pad_gate_cols(U, HS, HSP),
                  ((0, HSP - HS), (0, 0))).astype(matmul_dtype)          # (HSP, 4*HSP)
    b_p = _pad_gate_cols(bias.reshape(1, 4 * HS), HS, HSP)               # (1, 4*HSP) f32

    # Time-major, padded input (single fused pad+transpose pass in XLA).
    x_tm = jnp.pad(jnp.transpose(x, (1, 0, 2)),
                   ((0, seq_pad - seq), (0, bs_pad - bs), (0, 0)))

    def _wspec(shape):
        if single_buffer_weights:
            return pl.BlockSpec(shape, lambda bb, tb: (0, 0),
                                pipeline_mode=pl.Buffered(1))
        return pl.BlockSpec(shape, lambda bb, tb: (0, 0))

    kernel = functools.partial(_lstm_kernel, HSP=HSP, T_BLK=T_BLK, seq=seq,
                               mm_dtype=matmul_dtype)

    hseq_p, c_last_p = pl.pallas_call(
        kernel,
        out_shape=(
            jax.ShapeDtypeStruct((seq_pad, bs_pad, HSP), x.dtype),
            jax.ShapeDtypeStruct((bs_pad, HSP), x.dtype),
        ),
        grid_spec=pltpu.PrefetchScalarGridSpec(
            num_scalar_prefetch=0,
            grid=(n_bshard, n_tblk),
            in_specs=[
                pl.BlockSpec((T_BLK, bs_blk, in_sz), lambda bb, tb: (tb, bb, 0)),  # x
                _wspec((in_sz, 4 * HSP)),                                          # W
                _wspec((HSP, 4 * HSP)),                                            # U
                _wspec((1, 4 * HSP)),                                              # bias
            ],
            out_specs=(
                pl.BlockSpec((T_BLK, bs_blk, HSP), lambda bb, tb: (tb, bb, 0)),    # hidden_seq
                pl.BlockSpec((bs_blk, HSP), lambda bb, tb: (bb, 0)),               # c_T
            ),
            scratch_shapes=[
                pltpu.VMEM((T_BLK, bs_blk, 4 * HSP), jnp.float32),  # staged X@W + bias
                pltpu.VMEM((bs_blk, HSP), jnp.float32),             # h state
                pltpu.VMEM((bs_blk, HSP), jnp.float32),             # c state
            ],
        ),
        compiler_params=pltpu.CompilerParams(
            dimension_semantics=("parallel", "arbitrary"),  # batch shards || ; time serial
            vmem_limit_bytes=vmem_limit,
        ),
    )(x_tm, W_p, U_p, b_p)

    # Final layout conversion: the same transpose the PyTorch module performs.
    hidden_seq = jnp.transpose(hseq_p[:seq, :bs, :HS], (1, 0, 2))
    h_T = hidden_seq[:, -1, :]
    c_T = c_last_p[:bs, :HS]
    return hidden_seq, (h_T, c_T)


def cl_lstm_reference(x, W, U, bias):
    """Pure-JAX reference (mirrors the PyTorch loop), full-precision matmuls."""
    HS = U.shape[0]
    hp = lax.Precision.HIGHEST

    def step(carry, x_t):
        h, c = carry
        gates = (jnp.dot(x_t, W, precision=hp)
                 + jnp.dot(h, U, precision=hp) + bias)
        i = jax.nn.sigmoid(gates[:, :HS])
        f = jax.nn.sigmoid(gates[:, HS:2 * HS])
        g = jnp.tanh(gates[:, 2 * HS:3 * HS])
        o = jax.nn.sigmoid(gates[:, 3 * HS:])
        c = f * c + i * g
        h = o * jnp.tanh(c)
        return (h, c), h

    bs = x.shape[0]
    h0 = jnp.zeros((bs, HS), x.dtype)
    c0 = jnp.zeros((bs, HS), x.dtype)
    (hT, cT), hs = lax.scan(step, (h0, c0), jnp.transpose(x, (1, 0, 2)))
    return jnp.transpose(hs, (1, 0, 2)), (hT, cT)


if __name__ == "__main__":
    batch, seq, input_size, hidden_size = 2, 8, 16, 32

    key = jax.random.PRNGKey(0)
    kx, kw, ku, kb = jax.random.split(key, 4)

    # Deterministic init mirroring nn.Module.init_weights: U(-stdv, stdv).
    stdv = 1.0 / math.sqrt(hidden_size)
    W = jax.random.uniform(kw, (input_size, 4 * hidden_size),
                           minval=-stdv, maxval=stdv, dtype=jnp.float32)
    U = jax.random.uniform(ku, (hidden_size, 4 * hidden_size),
                           minval=-stdv, maxval=stdv, dtype=jnp.float32)
    bias = jax.random.uniform(kb, (4 * hidden_size,),
                              minval=-stdv, maxval=stdv, dtype=jnp.float32)
    x = jax.random.normal(kx, (batch, seq, input_size), dtype=jnp.float32)

    ref_seq, (ref_h, ref_c) = cl_lstm_reference(x, W, U, bias)

    # Full-precision (f32 MXU) path.
    hidden_seq, (h_T, c_T) = cl_lstm_forward(x, W, U, bias)
    jax.block_until_ready((hidden_seq, h_T, c_T))
    assert hidden_seq.shape == (batch, seq, hidden_size)
    assert h_T.shape == (batch, hidden_size) and c_T.shape == (batch, hidden_size)
    assert jnp.allclose(hidden_seq, ref_seq, atol=1e-4, rtol=1e-4)
    assert jnp.allclose(h_T, ref_h, atol=1e-4, rtol=1e-4)
    assert jnp.allclose(c_T, ref_c, atol=1e-4, rtol=1e-4)

    # bf16-operand MXU path (throughput config): looser tolerance.
    hs_bf, (h_bf, c_bf) = cl_lstm_forward(x, W, U, bias, matmul_dtype=jnp.bfloat16)
    jax.block_until_ready((hs_bf, h_bf, c_bf))
    assert jnp.allclose(hs_bf, ref_seq, atol=5e-2, rtol=5e-2)
    assert jnp.allclose(h_bf, ref_h, atol=5e-2, rtol=5e-2)
    assert jnp.allclose(c_bf, ref_c, atol=5e-2, rtol=5e-2)

    print("KERNEL_OK")
</pallas_src>

<mosaic_0001>
module attributes {stable_mosaic.version = 11 : i64} {
  func.func @_lstm_kernel(%arg0: i32, %arg1: i32, %arg2: memref<8x8x16xf32, #tpu.memory_space<vmem>>, %arg3: memref<16x512xf32, #tpu.memory_space<vmem>>, %arg4: memref<128x512xf32, #tpu.memory_space<vmem>>, %arg5: memref<1x512xf32, #tpu.memory_space<vmem>>, %arg6: memref<8x8x128xf32, #tpu.memory_space<vmem>>, %arg7: memref<8x128xf32, #tpu.memory_space<vmem>>, %arg8: memref<8x8x512xf32, #tpu.memory_space<vmem>>, %arg9: memref<8x128xf32, #tpu.memory_space<vmem>>, %arg10: memref<8x128xf32, #tpu.memory_space<vmem>>) attributes {dimension_semantics = [#tpu.dimension_semantics<parallel>, #tpu.dimension_semantics<arbitrary>], iteration_bounds = array<i64: 1, 1>, scalar_prefetch = 0 : i64, scratch_operands = 3 : i64, tpu.core_type = #tpu.core_type<tc>, window_params = [{transform_indices = @transform_0, window_bounds = array<i64: 8, 8, 16>}, {pipeline_mode = #tpu.pipeline_mode<synchronous>, transform_indices = @transform_1, window_bounds = array<i64: 16, 512>}, {pipeline_mode = #tpu.pipeline_mode<synchronous>, transform_indices = @transform_2, window_bounds = array<i64: 128, 512>}, {pipeline_mode = #tpu.pipeline_mode<synchronous>, transform_indices = @transform_3, window_bounds = array<i64: 1, 512>}, {transform_indices = @transform_4, window_bounds = array<i64: 8, 8, 128>}, {transform_indices = @transform_5, window_bounds = array<i64: 8, 128>}]} {
    %c0_i32 = arith.constant 0 : i32
    %0 = arith.cmpi eq, %arg1, %c0_i32 : i32
    %1 = arith.extui %0 : i1 to i32
    %c0_i32_0 = arith.constant 0 : i32
    %2 = arith.cmpi ne, %1, %c0_i32_0 : i32
    scf.if %2 {
      %cst_157 = arith.constant 0.000000e+00 : f32
      %377 = vector.broadcast %cst_157 : f32 to vector<8x128xf32>
      %c0_158 = arith.constant 0 : index
      %c0_159 = arith.constant 0 : index
      %378 = vector.load %arg9[%c0_158, %c0_159] : memref<8x128xf32, #tpu.memory_space<vmem>>, vector<8x128xf32>
      tpu.vector_store %arg9[%c0_158, %c0_159], %377 {strides = array<i32>} : memref<8x128xf32, #tpu.memory_space<vmem>>, vector<8x128xf32>,
      %cst_160 = arith.constant 0.000000e+00 : f32
      %379 = vector.broadcast %cst_160 : f32 to vector<8x128xf32>
      %c0_161 = arith.constant 0 : index
      %c0_162 = arith.constant 0 : index
      %380 = vector.load %arg10[%c0_161, %c0_162] : memref<8x128xf32, #tpu.memory_space<vmem>>, vector<8x128xf32>
      tpu.vector_store %arg10[%c0_161, %c0_162], %379 {strides = array<i32>} : memref<8x128xf32, #tpu.memory_space<vmem>>, vector<8x128xf32>,
    } else {
    }
    %c0 = arith.constant 0 : index
    %c0_1 = arith.constant 0 : index
    %c0_2 = arith.constant 0 : index
    %3 = vector.load %arg2[%c0, %c0_1, %c0_2] : memref<8x8x16xf32, #tpu.memory_space<vmem>>, vector<8x8x16xf32>
    %4 = vector.shape_cast %3 : vector<8x8x16xf32> to vector<64x16xf32>
    %c0_3 = arith.constant 0 : index
    %c0_4 = arith.constant 0 : index
    %5 = vector.load %arg3[%c0_3, %c0_4] : memref<16x512xf32, #tpu.memory_space<vmem>>, vector<16x512xf32>
    %cst = arith.constant dense<0.000000e+00> : vector<64x512xf32>
    %6 = tpu.matmul %4, %5, %cst {dimension_numbers = #tpu.dot_dimension_numbers<[1], [0], [0], [1], [0, 0, 1, 1], [], []>} : vector<64x16xf32>, vector<16x512xf32>, vector<64x512xf32> -> vector<64x512xf32>
    %c0_5 = arith.constant 0 : index
    %c0_6 = arith.constant 0 : index
    %7 = vector.load %arg5[%c0_5, %c0_6] : memref<1x512xf32, #tpu.memory_space<vmem>>, vector<1x512xf32>
    %8 = vector.broadcast %7 : vector<1x512xf32> to vector<64x512xf32>
    %9 = arith.addf %6, %8 : vector<64x512xf32>
    %10 = vector.shape_cast %9 : vector<64x512xf32> to vector<8x8x512xf32>
    %c0_7 = arith.constant 0 : index
    %c0_8 = arith.constant 0 : index
    %c0_9 = arith.constant 0 : index
    %11 = vector.load %arg8[%c0_7, %c0_8, %c0_9] : memref<8x8x512xf32, #tpu.memory_space<vmem>>, vector<8x8x512xf32>
    tpu.vector_store %arg8[%c0_7, %c0_8, %c0_9], %10 {strides = array<i32>} : memref<8x8x512xf32, #tpu.memory_space<vmem>>, vector<8x8x512xf32>,
    %c0_10 = arith.constant 0 : index
    %c0_11 = arith.constant 0 : index
    %12 = vector.load %arg4[%c0_10, %c0_11] : memref<128x512xf32, #tpu.memory_space<vmem>>, vector<128x512xf32>
    %c0_12 = arith.constant 0 : index
    %c0_13 = arith.constant 0 : index
    %13 = vector.load %arg9[%c0_12, %c0_13] : memref<8x128xf32, #tpu.memory_space<vmem>>, vector<8x128xf32>
    %c0_14 = arith.constant 0 : index
    %c0_15 = arith.constant 0 : index
    %14 = vector.load %arg10[%c0_14, %c0_15] : memref<8x128xf32, #tpu.memory_space<vmem>>, vector<8x128xf32>
    %c0_i32_16 = arith.constant 0 : i32
    %15 = arith.index_cast %c0_i32_16 : i32 to index
    %c0_17 = arith.constant 0 : index
    %c0_18 = arith.constant 0 : index
    %16 = vector.load %arg8[%15, %c0_17, %c0_18] : memref<8x8x512xf32, #tpu.memory_space<vmem>>, vector<1x8x512xf32>
    %17 = vector.shape_cast %16 : vector<1x8x512xf32> to vector<8x512xf32>
    %cst_19 = arith.constant dense<0.000000e+00> : vector<8x512xf32>
    %18 = tpu.matmul %13, %12, %cst_19 {dimension_numbers = #tpu.dot_dimension_numbers<[1], [0], [0], [1], [0, 0, 1, 1], [], []>} : vector<8x128xf32>, vector<128x512xf32>, vector<8x512xf32> -> vector<8x512xf32>
    %19 = arith.addf %17, %18 : vector<8x512xf32>
    %20 = vector.extract_strided_slice %19 {offsets = [0, 0], sizes = [8, 128], strides = [1, 1]} : vector<8x512xf32> to vector<8x128xf32>
    %cst_20 = arith.constant 5.000000e-01 : f32
    %21 = vector.broadcast %cst_20 : f32 to vector<8x128xf32>
    %22 = arith.mulf %21, %20 : vector<8x128xf32>
    %23 = math.tanh %22 : vector<8x128xf32>
    %cst_21 = arith.constant 5.000000e-01 : f32
    %24 = vector.broadcast %cst_21 : f32 to vector<8x128xf32>
    %25 = arith.mulf %24, %23 : vector<8x128xf32>
    %cst_22 = arith.constant 5.000000e-01 : f32
    %26 = vector.broadcast %cst_22 : f32 to vector<8x128xf32>
    %27 = arith.addf %25, %26 : vector<8x128xf32>
    %28 = vector.extract_strided_slice %19 {offsets = [0, 128], sizes = [8, 128], strides = [1, 1]} : vector<8x512xf32> to vector<8x128xf32>
    %cst_23 = arith.constant 5.000000e-01 : f32
    %29 = vector.broadcast %cst_23 : f32 to vector<8x128xf32>
    %30 = arith.mulf %29, %28 : vector<8x128xf32>
    %31 = math.tanh %30 : vector<8x128xf32>
    %cst_24 = arith.constant 5.000000e-01 : f32
    %32 = vector.broadcast %cst_24 : f32 to vector<8x128xf32>
    %33 = arith.mulf %32, %31 : vector<8x128xf32>
    %cst_25 = arith.constant 5.000000e-01 : f32
    %34 = vector.broadcast %cst_25 : f32 to vector<8x128xf32>
    %35 = arith.addf %33, %34 : vector<8x128xf32>
    %36 = vector.extract_strided_slice %19 {offsets = [0, 256], sizes = [8, 128], strides = [1, 1]} : vector<8x512xf32> to vector<8x128xf32>
    %37 = math.tanh %36 : vector<8x128xf32>
    %38 = vector.extract_strided_slice %19 {offsets = [0, 384], sizes = [8, 128], strides = [1, 1]} : vector<8x512xf32> to vector<8x128xf32>
    %cst_26 = arith.constant 5.000000e-01 : f32
    %39 = vector.broadcast %cst_26 : f32 to vector<8x128xf32>
    %40 = arith.mulf %39, %38 : vector<8x128xf32>
    %41 = math.tanh %40 : vector<8x128xf32>
    %cst_27 = arith.constant 5.000000e-01 : f32
    %42 = vector.broadcast %cst_27 : f32 to vector<8x128xf32>
    %43 = arith.mulf %42, %41 : vector<8x128xf32>
    %cst_28 = arith.constant 5.000000e-01 : f32
    %44 = vector.broadcast %cst_28 : f32 to vector<8x128xf32>
    %45 = arith.addf %43, %44 : vector<8x128xf32>
    %46 = arith.mulf %35, %14 : vector<8x128xf32>
    %47 = arith.mulf %27, %37 : vector<8x128xf32>
    %48 = arith.addf %46, %47 : vector<8x128xf32>
    %49 = math.tanh %48 : vector<8x128xf32>
    %50 = arith.mulf %45, %49 : vector<8x128xf32>
    %51 = arith.index_cast %c0_i32_16 : i32 to index
    %c0_29 = arith.constant 0 : index
    %c0_30 = arith.constant 0 : index
    %52 = vector.load %arg6[%51, %c0_29, %c0_30] : memref<8x8x128xf32, #tpu.memory_space<vmem>>, vector<1x8x128xf32>
    %53 = vector.shape_cast %52 : vector<1x8x128xf32> to vector<8x128xf32>
    %54 = vector.shape_cast %50 : vector<8x128xf32> to vector<1x8x128xf32>
    tpu.vector_store %arg6[%51, %c0_29, %c0_30], %54 {strides = array<i32>} : memref<8x8x128xf32, #tpu.memory_space<vmem>>, vector<1x8x128xf32>,
    %c8_i32 = arith.constant 8 : i32
    %55 = arith.muli %arg1, %c8_i32 : i32
    %56 = arith.addi %55, %c0_i32_16 : i32
    %c7_i32 = arith.constant 7 : i32
    %57 = arith.cmpi eq, %56, %c7_i32 : i32
    %58 = arith.extui %57 : i1 to i32
    %c0_i32_31 = arith.constant 0 : i32
    %59 = arith.cmpi ne, %58, %c0_i32_31 : i32
    scf.if %59 {
      %c0_157 = arith.constant 0 : index
      %c0_158 = arith.constant 0 : index
      %377 = vector.load %arg7[%c0_157, %c0_158] : memref<8x128xf32, #tpu.memory_space<vmem>>, vector<8x128xf32>
      tpu.vector_store %arg7[%c0_157, %c0_158], %48 {strides = array<i32>} : memref<8x128xf32, #tpu.memory_space<vmem>>, vector<8x128xf32>,
    } else {
    }
    %c1_i32 = arith.constant 1 : i32
    %60 = arith.index_cast %c1_i32 : i32 to index
    %c0_32 = arith.constant 0 : index
    %c0_33 = arith.constant 0 : index
    %61 = vector.load %arg8[%60, %c0_32, %c0_33] : memref<8x8x512xf32, #tpu.memory_space<vmem>>, vector<1x8x512xf32>
    %62 = vector.shape_cast %61 : vector<1x8x512xf32> to vector<8x512xf32>
    %cst_34 = arith.constant dense<0.000000e+00> : vector<8x512xf32>
    %63 = tpu.matmul %50, %12, %cst_34 {dimension_numbers = #tpu.dot_dimension_numbers<[1], [0], [0], [1], [0, 0, 1, 1], [], []>} : vector<8x128xf32>, vector<128x512xf32>, vector<8x512xf32> -> vector<8x512xf32>
    %64 = arith.addf %62, %63 : vector<8x512xf32>
    %65 = vector.extract_strided_slice %64 {offsets = [0, 0], sizes = [8, 128], strides = [1, 1]} : vector<8x512xf32> to vector<8x128xf32>
    %cst_35 = arith.constant 5.000000e-01 : f32
    %66 = vector.broadcast %cst_35 : f32 to vector<8x128xf32>
    %67 = arith.mulf %66, %65 : vector<8x128xf32>
    %68 = math.tanh %67 : vector<8x128xf32>
    %cst_36 = arith.constant 5.000000e-01 : f32
    %69 = vector.broadcast %cst_36 : f32 to vector<8x128xf32>
    %70 = arith.mulf %69, %68 : vector<8x128xf32>
    %cst_37 = arith.constant 5.000000e-01 : f32
    %71 = vector.broadcast %cst_37 : f32 to vector<8x128xf32>
    %72 = arith.addf %70, %71 : vector<8x128xf32>
    %73 = vector.extract_strided_slice %64 {offsets = [0, 128], sizes = [8, 128], strides = [1, 1]} : vector<8x512xf32> to vector<8x128xf32>
    %cst_38 = arith.constant 5.000000e-01 : f32
    %74 = vector.broadcast %cst_38 : f32 to vector<8x128xf32>
    %75 = arith.mulf %74, %73 : vector<8x128xf32>
    %76 = math.tanh %75 : vector<8x128xf32>
    %cst_39 = arith.constant 5.000000e-01 : f32
    %77 = vector.broadcast %cst_39 : f32 to vector<8x128xf32>
    %78 = arith.mulf %77, %76 : vector<8x128xf32>
    %cst_40 = arith.constant 5.000000e-01 : f32
    %79 = vector.broadcast %cst_40 : f32 to vector<8x128xf32>
    %80 = arith.addf %78, %79 : vector<8x128xf32>
    %81 = vector.extract_strided_slice %64 {offsets = [0, 256], sizes = [8, 128], strides = [1, 1]} : vector<8x512xf32> to vector<8x128xf32>
    %82 = math.tanh %81 : vector<8x128xf32>
    %83 = vector.extract_strided_slice %64 {offsets = [0, 384], sizes = [8, 128], strides = [1, 1]} : vector<8x512xf32> to vector<8x128xf32>
    %cst_41 = arith.constant 5.000000e-01 : f32
    %84 = vector.broadcast %cst_41 : f32 to vector<8x128xf32>
    %85 = arith.mulf %84, %83 : vector<8x128xf32>
    %86 = math.tanh %85 : vector<8x128xf32>
    %cst_42 = arith.constant 5.000000e-01 : f32
    %87 = vector.broadcast %cst_42 : f32 to vector<8x128xf32>
    %88 = arith.mulf %87, %86 : vector<8x128xf32>
    %cst_43 = arith.constant 5.000000e-01 : f32
    %89 = vector.broadcast %cst_43 : f32 to vector<8x128xf32>
    %90 = arith.addf %88, %89 : vector<8x128xf32>
    %91 = arith.mulf %80, %48 : vector<8x128xf32>
    %92 = arith.mulf %72, %82 : vector<8x128xf32>
    %93 = arith.addf %91, %92 : vector<8x128xf32>
    %94 = math.tanh %93 : vector<8x128xf32>
    %95 = arith.mulf %90, %94 : vector<8x128xf32>
    %96 = arith.index_cast %c1_i32 : i32 to index
    %c0_44 = arith.constant 0 : index
    %c0_45 = arith.constant 0 : index
    %97 = vector.load %arg6[%96, %c0_44, %c0_45] : memref<8x8x128xf32, #tpu.memory_space<vmem>>, vector<1x8x128xf32>
    %98 = vector.shape_cast %97 : vector<1x8x128xf32> to vector<8x128xf32>
    %99 = vector.shape_cast %95 : vector<8x128xf32> to vector<1x8x128xf32>
    tpu.vector_store %arg6[%96, %c0_44, %c0_45], %99 {strides = array<i32>} : memref<8x8x128xf32, #tpu.memory_space<vmem>>, vector<1x8x128xf32>,
    %c8_i32_46 = arith.constant 8 : i32
    %100 = arith.muli %arg1, %c8_i32_46 : i32
    %101 = arith.addi %100, %c1_i32 : i32
    %c7_i32_47 = arith.constant 7 : i32
    %102 = arith.cmpi eq, %101, %c7_i32_47 : i32
    %103 = arith.extui %102 : i1 to i32
    %c0_i32_48 = arith.constant 0 : i32
    %104 = arith.cmpi ne, %103, %c0_i32_48 : i32
    scf.if %104 {
      %c0_157 = arith.constant 0 : index
      %c0_158 = arith.constant 0 : index
      %377 = vector.load %arg7[%c0_157, %c0_158] : memref<8x128xf32, #tpu.memory_space<vmem>>, vector<8x128xf32>
      tpu.vector_store %arg7[%c0_157, %c0_158], %93 {strides = array<i32>} : memref<8x128xf32, #tpu.memory_space<vmem>>, vector<8x128xf32>,
    } else {
    }
    %c2_i32 = arith.constant 2 : i32
    %105 = arith.index_cast %c2_i32 : i32 to index
    %c0_49 = arith.constant 0 : index
    %c0_50 = arith.constant 0 : index
    %106 = vector.load %arg8[%105, %c0_49, %c0_50] : memref<8x8x512xf32, #tpu.memory_space<vmem>>, vector<1x8x512xf32>
    %107 = vector.shape_cast %106 : vector<1x8x512xf32> to vector<8x512xf32>
    %cst_51 = arith.constant dense<0.000000e+00> : vector<8x512xf32>
    %108 = tpu.matmul %95, %12, %cst_51 {dimension_numbers = #tpu.dot_dimension_numbers<[1], [0], [0], [1], [0, 0, 1, 1], [], []>} : vector<8x128xf32>, vector<128x512xf32>, vector<8x512xf32> -> vector<8x512xf32>
    %109 = arith.addf %107, %108 : vector<8x512xf32>
    %110 = vector.extract_strided_slice %109 {offsets = [0, 0], sizes = [8, 128], strides = [1, 1]} : vector<8x512xf32> to vector<8x128xf32>
    %cst_52 = arith.constant 5.000000e-01 : f32
    %111 = vector.broadcast %cst_52 : f32 to vector<8x128xf32>
    %112 = arith.mulf %111, %110 : vector<8x128xf32>
    %113 = math.tanh %112 : vector<8x128xf32>
    %cst_53 = arith.constant 5.000000e-01 : f32
    %114 = vector.broadcast %cst_53 : f32 to vector<8x128xf32>
    %115 = arith.mulf %114, %113 : vector<8x128xf32>
    %cst_54 = arith.constant 5.000000e-01 : f32
    %116 = vector.broadcast %cst_54 : f32 to vector<8x128xf32>
    %117 = arith.addf %115, %116 : vector<8x128xf32>
    %118 = vector.extract_strided_slice %109 {offsets = [0, 128], sizes = [8, 128], strides = [1, 1]} : vector<8x512xf32> to vector<8x128xf32>
    %cst_55 = arith.constant 5.000000e-01 : f32
    %119 = vector.broadcast %cst_55 : f32 to vector<8x128xf32>
    %120 = arith.mulf %119, %118 : vector<8x128xf32>
    %121 = math.tanh %120 : vector<8x128xf32>
    %cst_56 = arith.constant 5.000000e-01 : f32
    %122 = vector.broadcast %cst_56 : f32 to vector<8x128xf32>
    %123 = arith.mulf %122, %121 : vector<8x128xf32>
    %cst_57 = arith.constant 5.000000e-01 : f32
    %124 = vector.broadcast %cst_57 : f32 to vector<8x128xf32>
    %125 = arith.addf %123, %124 : vector<8x128xf32>
    %126 = vector.extract_strided_slice %109 {offsets = [0, 256], sizes = [8, 128], strides = [1, 1]} : vector<8x512xf32> to vector<8x128xf32>
    %127 = math.tanh %126 : vector<8x128xf32>
    %128 = vector.extract_strided_slice %109 {offsets = [0, 384], sizes = [8, 128], strides = [1, 1]} : vector<8x512xf32> to vector<8x128xf32>
    %cst_58 = arith.constant 5.000000e-01 : f32
    %129 = vector.broadcast %cst_58 : f32 to vector<8x128xf32>
    %130 = arith.mulf %129, %128 : vector<8x128xf32>
    %131 = math.tanh %130 : vector<8x128xf32>
    %cst_59 = arith.constant 5.000000e-01 : f32
    %132 = vector.broadcast %cst_59 : f32 to vector<8x128xf32>
    %133 = arith.mulf %132, %131 : vector<8x128xf32>
    %cst_60 = arith.constant 5.000000e-01 : f32
    %134 = vector.broadcast %cst_60 : f32 to vector<8x128xf32>
    %135 = arith.addf %133, %134 : vector<8x128xf32>
    %136 = arith.mulf %125, %93 : vector<8x128xf32>
    %137 = arith.mulf %117, %127 : vector<8x128xf32>
    %138 = arith.addf %136, %137 : vector<8x128xf32>
    %139 = math.tanh %138 : vector<8x128xf32>
    %140 = arith.mulf %135, %139 : vector<8x128xf32>
    %141 = arith.index_cast %c2_i32 : i32 to index
    %c0_61 = arith.constant 0 : index
    %c0_62 = arith.constant 0 : index
    %142 = vector.load %arg6[%141, %c0_61, %c0_62] : memref<8x8x128xf32, #tpu.memory_space<vmem>>, vector<1x8x128xf32>
    %143 = vector.shape_cast %142 : vector<1x8x128xf32> to vector<8x128xf32>
    %144 = vector.shape_cast %140 : vector<8x128xf32> to vector<1x8x128xf32>
    tpu.vector_store %arg6[%141, %c0_61, %c0_62], %144 {strides = array<i32>} : memref<8x8x128xf32, #tpu.memory_space<vmem>>, vector<1x8x128xf32>,
    %c8_i32_63 = arith.constant 8 : i32
    %145 = arith.muli %arg1, %c8_i32_63 : i32
    %146 = arith.addi %145, %c2_i32 : i32
    %c7_i32_64 = arith.constant 7 : i32
    %147 = arith.cmpi eq, %146, %c7_i32_64 : i32
    %148 = arith.extui %147 : i1 to i32
    %c0_i32_65 = arith.constant 0 : i32
    %149 = arith.cmpi ne, %148, %c0_i32_65 : i32
    scf.if %149 {
      %c0_157 = arith.constant 0 : index
      %c0_158 = arith.constant 0 : index
      %377 = vector.load %arg7[%c0_157, %c0_158] : memref<8x128xf32, #tpu.memory_space<vmem>>, vector<8x128xf32>
      tpu.vector_store %arg7[%c0_157, %c0_158], %138 {strides = array<i32>} : memref<8x128xf32, #tpu.memory_space<vmem>>, vector<8x128xf32>,
    } else {
    }
    %c3_i32 = arith.constant 3 : i32
    %150 = arith.index_cast %c3_i32 : i32 to index
    %c0_66 = arith.constant 0 : index
    %c0_67 = arith.constant 0 : index
    %151 = vector.load %arg8[%150, %c0_66, %c0_67] : memref<8x8x512xf32, #tpu.memory_space<vmem>>, vector<1x8x512xf32>
    %152 = vector.shape_cast %151 : vector<1x8x512xf32> to vector<8x512xf32>
    %cst_68 = arith.constant dense<0.000000e+00> : vector<8x512xf32>
    %153 = tpu.matmul %140, %12, %cst_68 {dimension_numbers = #tpu.dot_dimension_numbers<[1], [0], [0], [1], [0, 0, 1, 1], [], []>} : vector<8x128xf32>, vector<128x512xf32>, vector<8x512xf32> -> vector<8x512xf32>
    %154 = arith.addf %152, %153 : vector<8x512xf32>
    %155 = vector.extract_strided_slice %154 {offsets = [0, 0], sizes = [8, 128], strides = [1, 1]} : vector<8x512xf32> to vector<8x128xf32>
    %cst_69 = arith.constant 5.000000e-01 : f32
    %156 = vector.broadcast %cst_69 : f32 to vector<8x128xf32>
    %157 = arith.mulf %156, %155 : vector<8x128xf32>
    %158 = math.tanh %157 : vector<8x128xf32>
    %cst_70 = arith.constant 5.000000e-01 : f32
    %159 = vector.broadcast %cst_70 : f32 to vector<8x128xf32>
    %160 = arith.mulf %159, %158 : vector<8x128xf32>
    %cst_71 = arith.constant 5.000000e-01 : f32
    %161 = vector.broadcast %cst_71 : f32 to vector<8x128xf32>
    %162 = arith.addf %160, %161 : vector<8x128xf32>
    %163 = vector.extract_strided_slice %154 {offsets = [0, 128], sizes = [8, 128], strides = [1, 1]} : vector<8x512xf32> to vector<8x128xf32>
    %cst_72 = arith.constant 5.000000e-01 : f32
    %164 = vector.broadcast %cst_72 : f32 to vector<8x128xf32>
    %165 = arith.mulf %164, %163 : vector<8x128xf32>
    %166 = math.tanh %165 : vector<8x128xf32>
    %cst_73 = arith.constant 5.000000e-01 : f32
    %167 = vector.broadcast %cst_73 : f32 to vector<8x128xf32>
    %168 = arith.mulf %167, %166 : vector<8x128xf32>
    %cst_74 = arith.constant 5.000000e-01 : f32
    %169 = vector.broadcast %cst_74 : f32 to vector<8x128xf32>
    %170 = arith.addf %168, %169 : vector<8x128xf32>
    %171 = vector.extract_strided_slice %154 {offsets = [0, 256], sizes = [8, 128], strides = [1, 1]} : vector<8x512xf32> to vector<8x128xf32>
    %172 = math.tanh %171 : vector<8x128xf32>
    %173 = vector.extract_strided_slice %154 {offsets = [0, 384], sizes = [8, 128], strides = [1, 1]} : vector<8x512xf32> to vector<8x128xf32>
    %cst_75 = arith.constant 5.000000e-01 : f32
    %174 = vector.broadcast %cst_75 : f32 to vector<8x128xf32>
    %175 = arith.mulf %174, %173 : vector<8x128xf32>
    %176 = math.tanh %175 : vector<8x128xf32>
    %cst_76 = arith.constant 5.000000e-01 : f32
    %177 = vector.broadcast %cst_76 : f32 to vector<8x128xf32>
    %178 = arith.mulf %177, %176 : vector<8x128xf32>
    %cst_77 = arith.constant 5.000000e-01 : f32
    %179 = vector.broadcast %cst_77 : f32 to vector<8x128xf32>
    %180 = arith.addf %178, %179 : vector<8x128xf32>
    %181 = arith.mulf %170, %138 : vector<8x128xf32>
    %182 = arith.mulf %162, %172 : vector<8x128xf32>
    %183 = arith.addf %181, %182 : vector<8x128xf32>
    %184 = math.tanh %183 : vector<8x128xf32>
    %185 = arith.mulf %180, %184 : vector<8x128xf32>
    %186 = arith.index_cast %c3_i32 : i32 to index
    %c0_78 = arith.constant 0 : index
    %c0_79 = arith.constant 0 : index
    %187 = vector.load %arg6[%186, %c0_78, %c0_79] : memref<8x8x128xf32, #tpu.memory_space<vmem>>, vector<1x8x128xf32>
    %188 = vector.shape_cast %187 : vector<1x8x128xf32> to vector<8x128xf32>
    %189 = vector.shape_cast %185 : vector<8x128xf32> to vector<1x8x128xf32>
    tpu.vector_store %arg6[%186, %c0_78, %c0_79], %189 {strides = array<i32>} : memref<8x8x128xf32, #tpu.memory_space<vmem>>, vector<1x8x128xf32>,
    %c8_i32_80 = arith.constant 8 : i32
    %190 = arith.muli %arg1, %c8_i32_80 : i32
    %191 = arith.addi %190, %c3_i32 : i32
    %c7_i32_81 = arith.constant 7 : i32
    %192 = arith.cmpi eq, %191, %c7_i32_81 : i32
    %193 = arith.extui %192 : i1 to i32
    %c0_i32_82 = arith.constant 0 : i32
    %194 = arith.cmpi ne, %193, %c0_i32_82 : i32
    scf.if %194 {
      %c0_157 = arith.constant 0 : index
      %c0_158 = arith.constant 0 : index
      %377 = vector.load %arg7[%c0_157, %c0_158] : memref<8x128xf32, #tpu.memory_space<vmem>>, vector<8x128xf32>
      tpu.vector_store %arg7[%c0_157, %c0_158], %183 {strides = array<i32>} : memref<8x128xf32, #tpu.memory_space<vmem>>, vector<8x128xf32>,
    } else {
    }
    %c4_i32 = arith.constant 4 : i32
    %195 = arith.index_cast %c4_i32 : i32 to index
    %c0_83 = arith.constant 0 : index
    %c0_84 = arith.constant 0 : index
    %196 = vector.load %arg8[%195, %c0_83, %c0_84] : memref<8x8x512xf32, #tpu.memory_space<vmem>>, vector<1x8x512xf32>
    %197 = vector.shape_cast %196 : vector<1x8x512xf32> to vector<8x512xf32>
    %cst_85 = arith.constant dense<0.000000e+00> : vector<8x512xf32>
    %198 = tpu.matmul %185, %12, %cst_85 {dimension_numbers = #tpu.dot_dimension_numbers<[1], [0], [0], [1], [0, 0, 1, 1], [], []>} : vector<8x128xf32>, vector<128x512xf32>, vector<8x512xf32> -> vector<8x512xf32>
    %199 = arith.addf %197, %198 : vector<8x512xf32>
    %200 = vector.extract_strided_slice %199 {offsets = [0, 0], sizes = [8, 128], strides = [1, 1]} : vector<8x512xf32> to vector<8x128xf32>
    %cst_86 = arith.constant 5.000000e-01 : f32
    %201 = vector.broadcast %cst_86 : f32 to vector<8x128xf32>
    %202 = arith.mulf %201, %200 : vector<8x128xf32>
    %203 = math.tanh %202 : vector<8x128xf32>
    %cst_87 = arith.constant 5.000000e-01 : f32
    %204 = vector.broadcast %cst_87 : f32 to vector<8x128xf32>
    %205 = arith.mulf %204, %203 : vector<8x128xf32>
    %cst_88 = arith.constant 5.000000e-01 : f32
    %206 = vector.broadcast %cst_88 : f32 to vector<8x128xf32>
    %207 = arith.addf %205, %206 : vector<8x128xf32>
    %208 = vector.extract_strided_slice %199 {offsets = [0, 128], sizes = [8, 128], strides = [1, 1]} : vector<8x512xf32> to vector<8x128xf32>
    %cst_89 = arith.constant 5.000000e-01 : f32
    %209 = vector.broadcast %cst_89 : f32 to vector<8x128xf32>
    %210 = arith.mulf %209, %208 : vector<8x128xf32>
    %211 = math.tanh %210 : vector<8x128xf32>
    %cst_90 = arith.constant 5.000000e-01 : f32
    %212 = vector.broadcast %cst_90 : f32 to vector<8x128xf32>
    %213 = arith.mulf %212, %211 : vector<8x128xf32>
    %cst_91 = arith.constant 5.000000e-01 : f32
    %214 = vector.broadcast %cst_91 : f32 to vector<8x128xf32>
    %215 = arith.addf %213, %214 : vector<8x128xf32>
    %216 = vector.extract_strided_slice %199 {offsets = [0, 256], sizes = [8, 128], strides = [1, 1]} : vector<8x512xf32> to vector<8x128xf32>
    %217 = math.tanh %216 : vector<8x128xf32>
    %218 = vector.extract_strided_slice %199 {offsets = [0, 384], sizes = [8, 128], strides = [1, 1]} : vector<8x512xf32> to vector<8x128xf32>
    %cst_92 = arith.constant 5.000000e-01 : f32
    %219 = vector.broadcast %cst_92 : f32 to vector<8x128xf32>
    %220 = arith.mulf %219, %218 : vector<8x128xf32>
    %221 = math.tanh %220 : vector<8x128xf32>
    %cst_93 = arith.constant 5.000000e-01 : f32
    %222 = vector.broadcast %cst_93 : f32 to vector<8x128xf32>
    %223 = arith.mulf %222, %221 : vector<8x128xf32>
    %cst_94 = arith.constant 5.000000e-01 : f32
    %224 = vector.broadcast %cst_94 : f32 to vector<8x128xf32>
    %225 = arith.addf %223, %224 : vector<8x128xf32>
    %226 = arith.mulf %215, %183 : vector<8x128xf32>
    %227 = arith.mulf %207, %217 : vector<8x128xf32>
    %228 = arith.addf %226, %227 : vector<8x128xf32>
    %229 = math.tanh %228 : vector<8x128xf32>
    %230 = arith.mulf %225, %229 : vector<8x128xf32>
    %231 = arith.index_cast %c4_i32 : i32 to index
    %c0_95 = arith.constant 0 : index
    %c0_96 = arith.constant 0 : index
    %232 = vector.load %arg6[%231, %c0_95, %c0_96] : memref<8x8x128xf32, #tpu.memory_space<vmem>>, vector<1x8x128xf32>
    %233 = vector.shape_cast %232 : vector<1x8x128xf32> to vector<8x128xf32>
    %234 = vector.shape_cast %230 : vector<8x128xf32> to vector<1x8x128xf32>
    tpu.vector_store %arg6[%231, %c0_95, %c0_96], %234 {strides = array<i32>} : memref<8x8x128xf32, #tpu.memory_space<vmem>>, vector<1x8x128xf32>,
    %c8_i32_97 = arith.constant 8 : i32
    %235 = arith.muli %arg1, %c8_i32_97 : i32
    %236 = arith.addi %235, %c4_i32 : i32
    %c7_i32_98 = arith.constant 7 : i32
    %237 = arith.cmpi eq, %236, %c7_i32_98 : i32
    %238 = arith.extui %237 : i1 to i32
    %c0_i32_99 = arith.constant 0 : i32
    %239 = arith.cmpi ne, %238, %c0_i32_99 : i32
    scf.if %239 {
      %c0_157 = arith.constant 0 : index
      %c0_158 = arith.constant 0 : index
      %377 = vector.load %arg7[%c0_157, %c0_158] : memref<8x128xf32, #tpu.memory_space<vmem>>, vector<8x128xf32>
      tpu.vector_store %arg7[%c0_157, %c0_158], %228 {strides = array<i32>} : memref<8x128xf32, #tpu.memory_space<vmem>>, vector<8x128xf32>,
    } else {
    }
    %c5_i32 = arith.constant 5 : i32
    %240 = arith.index_cast %c5_i32 : i32 to index
    %c0_100 = arith.constant 0 : index
    %c0_101 = arith.constant 0 : index
    %241 = vector.load %arg8[%240, %c0_100, %c0_101] : memref<8x8x512xf32, #tpu.memory_space<vmem>>, vector<1x8x512xf32>
    %242 = vector.shape_cast %241 : vector<1x8x512xf32> to vector<8x512xf32>
    %cst_102 = arith.constant dense<0.000000e+00> : vector<8x512xf32>
    %243 = tpu.matmul %230, %12, %cst_102 {dimension_numbers = #tpu.dot_dimension_numbers<[1], [0], [0], [1], [0, 0, 1, 1], [], []>} : vector<8x128xf32>, vector<128x512xf32>, vector<8x512xf32> -> vector<8x512xf32>
    %244 = arith.addf %242, %243 : vector<8x512xf32>
    %245 = vector.extract_strided_slice %244 {offsets = [0, 0], sizes = [8, 128], strides = [1, 1]} : vector<8x512xf32> to vector<8x128xf32>
    %cst_103 = arith.constant 5.000000e-01 : f32
    %246 = vector.broadcast %cst_103 : f32 to vector<8x128xf32>
    %247 = arith.mulf %246, %245 : vector<8x128xf32>
    %248 = math.tanh %247 : vector<8x128xf32>
    %cst_104 = arith.constant 5.000000e-01 : f32
    %249 = vector.broadcast %cst_104 : f32 to vector<8x128xf32>
    %250 = arith.mulf %249, %248 : vector<8x128xf32>
    %cst_105 = arith.constant 5.000000e-01 : f32
    %251 = vector.broadcast %cst_105 : f32 to vector<8x128xf32>
    %252 = arith.addf %250, %251 : vector<8x128xf32>
    %253 = vector.extract_strided_slice %244 {offsets = [0, 128], sizes = [8, 128], strides = [1, 1]} : vector<8x512xf32> to vector<8x128xf32>
    %cst_106 = arith.constant 5.000000e-01 : f32
    %254 = vector.broadcast %cst_106 : f32 to vector<8x128xf32>
    %255 = arith.mulf %254, %253 : vector<8x128xf32>
    %256 = math.tanh %255 : vector<8x128xf32>
    %cst_107 = arith.constant 5.000000e-01 : f32
    %257 = vector.broadcast %cst_107 : f32 to vector<8x128xf32>
    %258 = arith.mulf %257, %256 : vector<8x128xf32>
    %cst_108 = arith.constant 5.000000e-01 : f32
    %259 = vector.broadcast %cst_108 : f32 to vector<8x128xf32>
    %260 = arith.addf %258, %259 : vector<8x128xf32>
    %261 = vector.extract_strided_slice %244 {offsets = [0, 256], sizes = [8, 128], strides = [1, 1]} : vector<8x512xf32> to vector<8x128xf32>
    %262 = math.tanh %261 : vector<8x128xf32>
    %263 = vector.extract_strided_slice %244 {offsets = [0, 384], sizes = [8, 128], strides = [1, 1]} : vector<8x512xf32> to vector<8x128xf32>
    %cst_109 = arith.constant 5.000000e-01 : f32
    %264 = vector.broadcast %cst_109 : f32 to vector<8x128xf32>
    %265 = arith.mulf %264, %263 : vector<8x128xf32>
    %266 = math.tanh %265 : vector<8x128xf32>
    %cst_110 = arith.constant 5.000000e-01 : f32
    %267 = vector.broadcast %cst_110 : f32 to vector<8x128xf32>
    %268 = arith.mulf %267, %266 : vector<8x128xf32>
    %cst_111 = arith.constant 5.000000e-01 : f32
    %269 = vector.broadcast %cst_111 : f32 to vector<8x128xf32>
    %270 = arith.addf %268, %269 : vector<8x128xf32>
    %271 = arith.mulf %260, %228 : vector<8x128xf32>
    %272 = arith.mulf %252, %262 : vector<8x128xf32>
    %273 = arith.addf %271, %272 : vector<8x128xf32>
    %274 = math.tanh %273 : vector<8x128xf32>
    %275 = arith.mulf %270, %274 : vector<8x128xf32>
    %276 = arith.index_cast %c5_i32 : i32 to index
    %c0_112 = arith.constant 0 : index
    %c0_113 = arith.constant 0 : index
    %277 = vector.load %arg6[%276, %c0_112, %c0_113] : memref<8x8x128xf32, #tpu.memory_space<vmem>>, vector<1x8x128xf32>
    %278 = vector.shape_cast %277 : vector<1x8x128xf32> to vector<8x128xf32>
    %279 = vector.shape_cast %275 : vector<8x128xf32> to vector<1x8x128xf32>
    tpu.vector_store %arg6[%276, %c0_112, %c0_113], %279 {strides = array<i32>} : memref<8x8x128xf32, #tpu.memory_space<vmem>>, vector<1x8x128xf32>,
    %c8_i32_114 = arith.constant 8 : i32
    %280 = arith.muli %arg1, %c8_i32_114 : i32
    %281 = arith.addi %280, %c5_i32 : i32
    %c7_i32_115 = arith.constant 7 : i32
    %282 = arith.cmpi eq, %281, %c7_i32_115 : i32
    %283 = arith.extui %282 : i1 to i32
    %c0_i32_116 = arith.constant 0 : i32
    %284 = arith.cmpi ne, %283, %c0_i32_116 : i32
    scf.if %284 {
      %c0_157 = arith.constant 0 : index
      %c0_158 = arith.constant 0 : index
      %377 = vector.load %arg7[%c0_157, %c0_158] : memref<8x128xf32, #tpu.memory_space<vmem>>, vector<8x128xf32>
      tpu.vector_store %arg7[%c0_157, %c0_158], %273 {strides = array<i32>} : memref<8x128xf32, #tpu.memory_space<vmem>>, vector<8x128xf32>,
    } else {
    }
    %c6_i32 = arith.constant 6 : i32
    %285 = arith.index_cast %c6_i32 : i32 to index
    %c0_117 = arith.constant 0 : index
    %c0_118 = arith.constant 0 : index
    %286 = vector.load %arg8[%285, %c0_117, %c0_118] : memref<8x8x512xf32, #tpu.memory_space<vmem>>, vector<1x8x512xf32>
    %287 = vector.shape_cast %286 : vector<1x8x512xf32> to vector<8x512xf32>
    %cst_119 = arith.constant dense<0.000000e+00> : vector<8x512xf32>
    %288 = tpu.matmul %275, %12, %cst_119 {dimension_numbers = #tpu.dot_dimension_numbers<[1], [0], [0], [1], [0, 0, 1, 1], [], []>} : vector<8x128xf32>, vector<128x512xf32>, vector<8x512xf32> -> vector<8x512xf32>
    %289 = arith.addf %287, %288 : vector<8x512xf32>
    %290 = vector.extract_strided_slice %289 {offsets = [0, 0], sizes = [8, 128], strides = [1, 1]} : vector<8x512xf32> to vector<8x128xf32>
    %cst_120 = arith.constant 5.000000e-01 : f32
    %291 = vector.broadcast %cst_120 : f32 to vector<8x128xf32>
    %292 = arith.mulf %291, %290 : vector<8x128xf32>
    %293 = math.tanh %292 : vector<8x128xf32>
    %cst_121 = arith.constant 5.000000e-01 : f32
    %294 = vector.broadcast %cst_121 : f32 to vector<8x128xf32>
    %295 = arith.mulf %294, %293 : vector<8x128xf32>
    %cst_122 = arith.constant 5.000000e-01 : f32
    %296 = vector.broadcast %cst_122 : f32 to vector<8x128xf32>
    %297 = arith.addf %295, %296 : vector<8x128xf32>
    %298 = vector.extract_strided_slice %289 {offsets = [0, 128], sizes = [8, 128], strides = [1, 1]} : vector<8x512xf32> to vector<8x128xf32>
    %cst_123 = arith.constant 5.000000e-01 : f32
    %299 = vector.broadcast %cst_123 : f32 to vector<8x128xf32>
    %300 = arith.mulf %299, %298 : vector<8x128xf32>
    %301 = math.tanh %300 : vector<8x128xf32>
    %cst_124 = arith.constant 5.000000e-01 : f32
    %302 = vector.broadcast %cst_124 : f32 to vector<8x128xf32>
    %303 = arith.mulf %302, %301 : vector<8x128xf32>
    %cst_125 = arith.constant 5.000000e-01 : f32
    %304 = vector.broadcast %cst_125 : f32 to vector<8x128xf32>
    %305 = arith.addf %303, %304 : vector<8x128xf32>
    %306 = vector.extract_strided_slice %289 {offsets = [0, 256], sizes = [8, 128], strides = [1, 1]} : vector<8x512xf32> to vector<8x128xf32>
    %307 = math.tanh %306 : vector<8x128xf32>
    %308 = vector.extract_strided_slice %289 {offsets = [0, 384], sizes = [8, 128], strides = [1, 1]} : vector<8x512xf32> to vector<8x128xf32>
    %cst_126 = arith.constant 5.000000e-01 : f32
    %309 = vector.broadcast %cst_126 : f32 to vector<8x128xf32>
    %310 = arith.mulf %309, %308 : vector<8x128xf32>
    %311 = math.tanh %310 : vector<8x128xf32>
    %cst_127 = arith.constant 5.000000e-01 : f32
    %312 = vector.broadcast %cst_127 : f32 to vector<8x128xf32>
    %313 = arith.mulf %312, %311 : vector<8x128xf32>
    %cst_128 = arith.constant 5.000000e-01 : f32
    %314 = vector.broadcast %cst_128 : f32 to vector<8x128xf32>
    %315 = arith.addf %313, %314 : vector<8x128xf32>
    %316 = arith.mulf %305, %273 : vector<8x128xf32>
    %317 = arith.mulf %297, %307 : vector<8x128xf32>
    %318 = arith.addf %316, %317 : vector<8x128xf32>
    %319 = math.tanh %318 : vector<8x128xf32>
    %320 = arith.mulf %315, %319 : vector<8x128xf32>
    %321 = arith.index_cast %c6_i32 : i32 to index
    %c0_129 = arith.constant 0 : index
    %c0_130 = arith.constant 0 : index
    %322 = vector.load %arg6[%321, %c0_129, %c0_130] : memref<8x8x128xf32, #tpu.memory_space<vmem>>, vector<1x8x128xf32>
    %323 = vector.shape_cast %322 : vector<1x8x128xf32> to vector<8x128xf32>
    %324 = vector.shape_cast %320 : vector<8x128xf32> to vector<1x8x128xf32>
    tpu.vector_store %arg6[%321, %c0_129, %c0_130], %324 {strides = array<i32>} : memref<8x8x128xf32, #tpu.memory_space<vmem>>, vector<1x8x128xf32>,
    %c8_i32_131 = arith.constant 8 : i32
    %325 = arith.muli %arg1, %c8_i32_131 : i32
    %326 = arith.addi %325, %c6_i32 : i32
    %c7_i32_132 = arith.constant 7 : i32
    %327 = arith.cmpi eq, %326, %c7_i32_132 : i32
    %328 = arith.extui %327 : i1 to i32
    %c0_i32_133 = arith.constant 0 : i32
    %329 = arith.cmpi ne, %328, %c0_i32_133 : i32
    scf.if %329 {
      %c0_157 = arith.constant 0 : index
      %c0_158 = arith.constant 0 : index
      %377 = vector.load %arg7[%c0_157, %c0_158] : memref<8x128xf32, #tpu.memory_space<vmem>>, vector<8x128xf32>
      tpu.vector_store %arg7[%c0_157, %c0_158], %318 {strides = array<i32>} : memref<8x128xf32, #tpu.memory_space<vmem>>, vector<8x128xf32>,
    } else {
    }
    %c7_i32_134 = arith.constant 7 : i32
    %330 = arith.index_cast %c7_i32_134 : i32 to index
    %c0_135 = arith.constant 0 : index
    %c0_136 = arith.constant 0 : index
    %331 = vector.load %arg8[%330, %c0_135, %c0_136] : memref<8x8x512xf32, #tpu.memory_space<vmem>>, vector<1x8x512xf32>
    %332 = vector.shape_cast %331 : vector<1x8x512xf32> to vector<8x512xf32>
    %cst_137 = arith.constant dense<0.000000e+00> : vector<8x512xf32>
    %333 = tpu.matmul %320, %12, %cst_137 {dimension_numbers = #tpu.dot_dimension_numbers<[1], [0], [0], [1], [0, 0, 1, 1], [], []>} : vector<8x128xf32>, vector<128x512xf32>, vector<8x512xf32> -> vector<8x512xf32>
    %334 = arith.addf %332, %333 : vector<8x512xf32>
    %335 = vector.extract_strided_slice %334 {offsets = [0, 0], sizes = [8, 128], strides = [1, 1]} : vector<8x512xf32> to vector<8x128xf32>
    %cst_138 = arith.constant 5.000000e-01 : f32
    %336 = vector.broadcast %cst_138 : f32 to vector<8x128xf32>
    %337 = arith.mulf %336, %335 : vector<8x128xf32>
    %338 = math.tanh %337 : vector<8x128xf32>
    %cst_139 = arith.constant 5.000000e-01 : f32
    %339 = vector.broadcast %cst_139 : f32 to vector<8x128xf32>
    %340 = arith.mulf %339, %338 : vector<8x128xf32>
    %cst_140 = arith.constant 5.000000e-01 : f32
    %341 = vector.broadcast %cst_140 : f32 to vector<8x128xf32>
    %342 = arith.addf %340, %341 : vector<8x128xf32>
    %343 = vector.extract_strided_slice %334 {offsets = [0, 128], sizes = [8, 128], strides = [1, 1]} : vector<8x512xf32> to vector<8x128xf32>
    %cst_141 = arith.constant 5.000000e-01 : f32
    %344 = vector.broadcast %cst_141 : f32 to vector<8x128xf32>
    %345 = arith.mulf %344, %343 : vector<8x128xf32>
    %346 = math.tanh %345 : vector<8x128xf32>
    %cst_142 = arith.constant 5.000000e-01 : f32
    %347 = vector.broadcast %cst_142 : f32 to vector<8x128xf32>
    %348 = arith.mulf %347, %346 : vector<8x128xf32>
    %cst_143 = arith.constant 5.000000e-01 : f32
    %349 = vector.broadcast %cst_143 : f32 to vector<8x128xf32>
    %350 = arith.addf %348, %349 : vector<8x128xf32>
    %351 = vector.extract_strided_slice %334 {offsets = [0, 256], sizes = [8, 128], strides = [1, 1]} : vector<8x512xf32> to vector<8x128xf32>
    %352 = math.tanh %351 : vector<8x128xf32>
    %353 = vector.extract_strided_slice %334 {offsets = [0, 384], sizes = [8, 128], strides = [1, 1]} : vector<8x512xf32> to vector<8x128xf32>
    %cst_144 = arith.constant 5.000000e-01 : f32
    %354 = vector.broadcast %cst_144 : f32 to vector<8x128xf32>
    %355 = arith.mulf %354, %353 : vector<8x128xf32>
    %356 = math.tanh %355 : vector<8x128xf32>
    %cst_145 = arith.constant 5.000000e-01 : f32
    %357 = vector.broadcast %cst_145 : f32 to vector<8x128xf32>
    %358 = arith.mulf %357, %356 : vector<8x128xf32>
    %cst_146 = arith.constant 5.000000e-01 : f32
    %359 = vector.broadcast %cst_146 : f32 to vector<8x128xf32>
    %360 = arith.addf %358, %359 : vector<8x128xf32>
    %361 = arith.mulf %350, %318 : vector<8x128xf32>
    %362 = arith.mulf %342, %352 : vector<8x128xf32>
    %363 = arith.addf %361, %362 : vector<8x128xf32>
    %364 = math.tanh %363 : vector<8x128xf32>
    %365 = arith.mulf %360, %364 : vector<8x128xf32>
    %366 = arith.index_cast %c7_i32_134 : i32 to index
    %c0_147 = arith.constant 0 : index
    %c0_148 = arith.constant 0 : index
    %367 = vector.load %arg6[%366, %c0_147, %c0_148] : memref<8x8x128xf32, #tpu.memory_space<vmem>>, vector<1x8x128xf32>
    %368 = vector.shape_cast %367 : vector<1x8x128xf32> to vector<8x128xf32>
    %369 = vector.shape_cast %365 : vector<8x128xf32> to vector<1x8x128xf32>
    tpu.vector_store %arg6[%366, %c0_147, %c0_148], %369 {strides = array<i32>} : memref<8x8x128xf32, #tpu.memory_space<vmem>>, vector<1x8x128xf32>,
    %c8_i32_149 = arith.constant 8 : i32
    %370 = arith.muli %arg1, %c8_i32_149 : i32
    %371 = arith.addi %370, %c7_i32_134 : i32
    %c7_i32_150 = arith.constant 7 : i32
    %372 = arith.cmpi eq, %371, %c7_i32_150 : i32
    %373 = arith.extui %372 : i1 to i32
    %c0_i32_151 = arith.constant 0 : i32
    %374 = arith.cmpi ne, %373, %c0_i32_151 : i32
    scf.if %374 {
      %c0_157 = arith.constant 0 : index
      %c0_158 = arith.constant 0 : index
      %377 = vector.load %arg7[%c0_157, %c0_158] : memref<8x128xf32, #tpu.memory_space<vmem>>, vector<8x128xf32>
      tpu.vector_store %arg7[%c0_157, %c0_158], %363 {strides = array<i32>} : memref<8x128xf32, #tpu.memory_space<vmem>>, vector<8x128xf32>,
    } else {
    }
    %c8_i32_152 = arith.constant 8 : i32
    %c0_153 = arith.constant 0 : index
    %c0_154 = arith.constant 0 : index
    %375 = vector.load %arg9[%c0_153, %c0_154] : memref<8x128xf32, #tpu.memory_space<vmem>>, vector<8x128xf32>
    tpu.vector_store %arg9[%c0_153, %c0_154], %365 {strides = array<i32>} : memref<8x128xf32, #tpu.memory_space<vmem>>, vector<8x128xf32>,
    %c0_155 = arith.constant 0 : index
    %c0_156 = arith.constant 0 : index
    %376 = vector.load %arg10[%c0_155, %c0_156] : memref<8x128xf32, #tpu.memory_space<vmem>>, vector<8x128xf32>
    tpu.vector_store %arg10[%c0_155, %c0_156], %363 {strides = array<i32>} : memref<8x128xf32, #tpu.memory_space<vmem>>, vector<8x128xf32>,
    return
  }
  func.func @transform_0(%arg0: i32, %arg1: i32) -> (i32, i32, i32) {
    %c0_i32 = arith.constant 0 : i32
    %c0_i32_0 = arith.constant 0 : i32
    return %arg1, %arg0, %c0_i32 : i32, i32, i32
  }
  func.func @transform_1(%arg0: i32, %arg1: i32) -> (i32, i32) {
    %c0_i32 = arith.constant 0 : i32
    %c0_i32_0 = arith.constant 0 : i32
    %c0_i32_1 = arith.constant 0 : i32
    return %c0_i32, %c0_i32_0 : i32, i32
  }
  func.func @transform_2(%arg0: i32, %arg1: i32) -> (i32, i32) {
    %c0_i32 = arith.constant 0 : i32
    %c0_i32_0 = arith.constant 0 : i32
    %c0_i32_1 = arith.constant 0 : i32
    return %c0_i32, %c0_i32_0 : i32, i32
  }
  func.func @transform_3(%arg0: i32, %arg1: i32) -> (i32, i32) {
    %c0_i32 = arith.constant 0 : i32
    %c0_i32_0 = arith.constant 0 : i32
    %c0_i32_1 = arith.constant 0 : i32
    return %c0_i32, %c0_i32_0 : i32, i32
  }
  func.func @transform_4(%arg0: i32, %arg1: i32) -> (i32, i32, i32) {
    %c0_i32 = arith.constant 0 : i32
    %c0_i32_0 = arith.constant 0 : i32
    return %arg1, %arg0, %c0_i32 : i32, i32, i32
  }
  func.func @transform_5(%arg0: i32, %arg1: i32) -> (i32, i32) {
    %c0_i32 = arith.constant 0 : i32
    %c0_i32_0 = arith.constant 0 : i32
    return %arg0, %c0_i32 : i32, i32
  }
}

</mosaic_0001>

<llo_original>
// kernel: tpu_custom_call.1
$region0: #{tpu_custom_call.1}
  #allocation0 [shape = 'u32[]', space=smem, size = 0x4, offset = 0x4, fixed_abs, tag = 'smem constant byte address 0x4 - core index']
  #allocation1 [shape = 'u32[144,128]{1,0:T(1,128)}', space=vmem, size = 0x12000, scoped, tag = 'internal scratch']
  #allocation2 [shape = 'f32[8,8,512]{2,1,0:T(8,128)}', space=vmem, size = 0x20000, scoped, tag = 'scratch operand']
  #allocation3 [shape = 'f32[8,128]{1,0:T(8,128)}', space=vmem, size = 0x1000, scoped, tag = 'scratch operand']
  #allocation4 [shape = 'f32[8,128]{1,0:T(8,128)}', space=vmem, size = 0x1000, scoped, tag = 'scratch operand']
  %s0 = inlined_call_operand.hbm [shape: f32[8,8,16], index: 0, kind: input, shape index: {}]
  %s1 = inlined_call_operand.hbm [shape: f32[16,512], index: 1, kind: input, shape index: {}]
  %s2 = inlined_call_operand.hbm [shape: f32[128,512], index: 2, kind: input, shape index: {}]
  %s3 = inlined_call_operand.vmem [shape: f32[1,512], index: 3, kind: input, shape index: {}]
  %s4 = inlined_call_operand.hbm [shape: f32[8,8,128], index: 4, kind: output, shape index: {0}]
  %s5 = inlined_call_operand.hbm [shape: f32[8,128], index: 5, kind: output, shape index: {1}]
  %6 = xla_tuple %s4, %s5
  %s7 = sld [smem:[#allocation0]]
  $region82: #{tpu_custom_call.1} parent=0
    _
  %s9 = ssub.s32 1, %s7
  %s10 = scalar_select 0, %s9, %s7
  $region1: #{tpu_custom_call.1} parent=0
    #allocation5 [shape = 'u8[32768]{0}', space=vmem, size = 0x8000, scoped, tag = 'input window, operand 0, single buffered']
    #allocation6 [shape = 's32[1]{0}', space=sflag, size = 0x4, scoped, tag = 'scoped memory for tpu_custom_call.1']
    #allocation7 [shape = 's32[1]{0}', space=sflag, size = 0x4, scoped, tag = 'scoped memory for tpu_custom_call.1']
    #allocation8 [shape = 'u8[32768]{0}', space=vmem, size = 0x8000, scoped, tag = 'input window, operand 1, single buffered']
    #allocation9 [shape = 's32[1]{0}', space=sflag, size = 0x4, scoped, tag = 'scoped memory for tpu_custom_call.1']
    #allocation10 [shape = 'u8[262144]{0}', space=vmem, size = 0x40000, scoped, tag = 'input window, operand 2, single buffered']
    #allocation11 [shape = 'u8[32768]{0}', space=vmem, size = 0x8000, scoped, tag = 'output window, operand 0, single buffered']
    #allocation12 [shape = 'u8[4096]{0}', space=vmem, size = 0x1000, scoped, tag = 'output window, operand 1, single buffered']
    #allocation13 [shape = 's32[1]{0}', space=sflag, size = 0x4, scoped, tag = 'scoped memory for tpu_custom_call.1']
    %11 = vsyncpa [#allocation6], 0
    %12 = vsyncpa [#allocation9], 0
    %13 = vsyncpa [#allocation7], 0
    %14 = vsyncpa [#allocation13], 0
    // Predicated region
    $region2: #{tpu_custom_call.1} parent=1 // pred_check
      _
    $region3: #{tpu_custom_call.1} parent=1 // pred_check_branch
      %16 = sbr.rel (0) target = $region5
    $region4: #{tpu_custom_call.1} parent=1 // pred_region
      %s18 = ssub.s32 1024, 1024
      %19 = vsyncadd [#allocation6], %s18
      %s20 = sshll.u32 [#allocation5], 4
      %s21 = int_to_ptr.vmem [resolvable:$true] %s20
      %26 = dma.hbm_to_vmem [thread:$0]  %s0, 1024, %s21, [#allocation6], 128, 128, 8
    $region5: #{tpu_custom_call.1} parent=1 // pred_fallthru
      _
    // Predicated region
    $region6: #{tpu_custom_call.1} parent=1 // pred_check
      _
    $region7: #{tpu_custom_call.1} parent=1 // pred_check_branch
      %28 = sbr.rel (0) target = $region9
    $region8: #{tpu_custom_call.1} parent=1 // pred_region
      %s30 = ssub.s32 1024, 1024
      %31 = vsyncadd [#allocation9], %s30
      %s32 = sshll.u32 [#allocation8], 4
      %s33 = int_to_ptr.vmem [resolvable:$true] %s32
      %38 = dma.hbm_to_vmem [thread:$0]  %s1, 1024, %s33, [#allocation9], 512, 512, 32
    $region9: #{tpu_custom_call.1} parent=1 // pred_fallthru
      _
    // Predicated region
    $region10: #{tpu_custom_call.1} parent=1 // pred_check
      _
    $region11: #{tpu_custom_call.1} parent=1 // pred_check_branch
      %40 = sbr.rel (0) target = $region13
    $region12: #{tpu_custom_call.1} parent=1 // pred_region
      %s42 = ssub.s32 8192, 8192
      %43 = vsyncadd [#allocation9], %s42
      %s44 = sshll.u32 [#allocation10], 4
      %s45 = int_to_ptr.vmem [resolvable:$true] %s44
      %50 = dma.hbm_to_vmem [thread:$0]  %s2, 8192, %s45, [#allocation9], 512, 512, 32
    $region13: #{tpu_custom_call.1} parent=1 // pred_fallthru
      _
    // Predicated region
    $region14: #{tpu_custom_call.1} parent=1 // pred_check
      _
    $region15: #{tpu_custom_call.1} parent=1 // pred_check_branch
      %52 = sbr.rel (0) target = $region17
    $region16: #{tpu_custom_call.1} parent=1 // pred_region
      _
    $region17: #{tpu_custom_call.1} parent=1 // pred_fallthru
      _
    // Predicated region
    $region18: #{tpu_custom_call.1} parent=1 // pred_check
      _
    $region19: #{tpu_custom_call.1} parent=1 // pred_check_branch
      %54 = sbr.rel (0) target = $region21
    $region20: #{tpu_custom_call.1} parent=1 // pred_region
      %55 = dma.done [#allocation6], 1024
    $region21: #{tpu_custom_call.1} parent=1 // pred_fallthru
      _
    // Predicated region
    $region22: #{tpu_custom_call.1} parent=1 // pred_check
      _
    $region23: #{tpu_custom_call.1} parent=1 // pred_check_branch
      %57 = sbr.rel (0) target = $region25
    $region24: #{tpu_custom_call.1} parent=1 // pred_region
      %58 = dma.done [#allocation9], 1024
    $region25: #{tpu_custom_call.1} parent=1 // pred_fallthru
      _
    // Predicated region
    $region26: #{tpu_custom_call.1} parent=1 // pred_check
      _
    $region27: #{tpu_custom_call.1} parent=1 // pred_check_branch
      %60 = sbr.rel (0) target = $region29
    $region28: #{tpu_custom_call.1} parent=1 // pred_region
      %61 = dma.done [#allocation9], 8192
    $region29: #{tpu_custom_call.1} parent=1 // pred_fallthru
      _
    %p62 = scmp.eq.s32.totalorder 0, 0
    // Predicated region
    $region30: #{tpu_custom_call.1} parent=1 // pred_check
      %p63 = pneg %p62
    $region31: #{tpu_custom_call.1} parent=1 // pred_check_branch
      %65 = sbr.rel (%p63) target = $region33
    $region32: #{tpu_custom_call.1} parent=1 // pred_region
      %66 = vst [vmem:[#allocation3] sm:$0xff] 0.0
      %67 = vst [vmem:[#allocation4] sm:$0xff] 0.0
    $region33: #{tpu_custom_call.1} parent=1 // pred_fallthru
      _
    %v68 = vld [vmem:[#allocation5] sm:$0xff]
    %v69 = vld [vmem:[#allocation5 + $0x8] sm:$0xff]
    %v70 = vld [vmem:[#allocation5 + $0x10] sm:$0xff]
    %v71 = vld [vmem:[#allocation5 + $0x18] sm:$0xff]
    %v72 = vld [vmem:[#allocation5 + $0x20] sm:$0xff]
    %v73 = vld [vmem:[#allocation5 + $0x28] sm:$0xff]
    %v74 = vld [vmem:[#allocation5 + $0x30] sm:$0xff]
    %v75 = vld [vmem:[#allocation5 + $0x38] sm:$0xff]
    %v76 = vld [vmem:[#allocation8] sm:$0xff]
    %v77 = vld [vmem:[#allocation8 + $0x8] sm:$0xff]
    %v78 = vld [vmem:[#allocation8 + $0x10] sm:$0xff]
    %v79 = vld [vmem:[#allocation8 + $0x18] sm:$0xff]
    %v80 = vld [vmem:[#allocation8 + $0x20] sm:$0xff]
    %v81 = vld [vmem:[#allocation8 + $0x28] sm:$0xff]
    %v82 = vld [vmem:[#allocation8 + $0x30] sm:$0xff]
    %v83 = vld [vmem:[#allocation8 + $0x38] sm:$0xff]
    %v84 = vld [vmem:[%s3] sm:$0xf]
    %v86 = vlaneseq
    %v87 = vshrl.u32 %v86, 7
    %v88 = vsub.s32 0, %v87
    %v89 = vrot.slane %v84, %v88
    %v90 = vlaneseq
    %v91 = vshrl.u32 %v90, 7
    %v92 = vsub.s32 1, %v91
    %v93 = vrot.slane %v84, %v92
    %v94 = vlaneseq
    %v95 = vshrl.u32 %v94, 7
    %v96 = vsub.s32 2, %v95
    %v97 = vrot.slane %v84, %v96
    %v98 = vlaneseq
    %v99 = vshrl.u32 %v98, 7
    %v100 = vsub.s32 3, %v99
    %v101 = vrot.slane %v84, %v100
    %vm106 = vcmask 130048
    %v108 = vsel %vm106, %v68, 0
    %v111 = vsel %vm106, %v69, 0
    %v114 = vsel %vm106, %v70, 0
    %v117 = vsel %vm106, %v71, 0
    %v120 = vsel %vm106, %v72, 0
    %v123 = vsel %vm106, %v73, 0
    %v126 = vsel %vm106, %v74, 0
    %v129 = vsel %vm106, %v75, 0
    %131 = vmatprep.subr.mxu0 %v77
    %132 = vmatpush1.msra.mxu0 %v76
    %133 = vmatprep.subr.mxu0 %v81
    %134 = vmatpush1.msra.mxu0 %v80
    %135 = vmatprep.subr.mxu0 0.0
    %136 = vmatpush1.msra.mxu0 0.0
    %137 = vmatprep.subr.mxu0 0.0
    %138 = vmatpush1.msra.mxu0 0.0
    %139 = vmatprep.subr.mxu0 0.0
    %140 = vmatpush1.msra.mxu0 0.0
    %141 = vmatprep.subr.mxu0 0.0
    %142 = vmatpush1.msra.mxu0 0.0
    %143 = vmatprep.subr.mxu0 0.0
    %144 = vmatpush1.msra.mxu0 0.0
    %145 = vmatprep.subr.mxu0 0.0
    %146 = vmatpush1.msra.mxu0 0.0
    %147 = vmatprep.subr.mxu0 0.0
    %148 = vmatpush1.msra.mxu0 0.0
    %149 = vmatprep.subr.mxu0 0.0
    %150 = vmatpush1.msra.mxu0 0.0
    %151 = vmatprep.subr.mxu0 0.0
    %152 = vmatpush1.msra.mxu0 0.0
    %153 = vmatprep.subr.mxu0 0.0
    %154 = vmatpush1.msra.mxu0 0.0
    %155 = vmatprep.subr.mxu0 0.0
    %156 = vmatpush1.msra.mxu0 0.0
    %157 = vmatprep.subr.mxu0 0.0
    %158 = vmatpush1.msra.mxu0 0.0
    %159 = vmatprep.subr.mxu0 0.0
    %160 = vmatpush1.msra.mxu0 0.0
    %161 = vmatprep.subr.mxu0 0.0
    %162 = vmatpush1.msra.mxu0 0.0
    %163 = vmatprep.subr.mxu0 0.0
    %164 = vmatpush1.msra.mxu0 0.0
    %165 = vmatprep.subr.mxu0 0.0
    %166 = vmatpush1.msra.mxu0 0.0
    %167 = vmatprep.subr.mxu0 0.0
    %168 = vmatpush1.msra.mxu0 0.0
    %169 = vmatprep.subr.mxu0 0.0
    %170 = vmatpush1.msra.mxu0 0.0
    %171 = vmatprep.subr.mxu0 0.0
    %172 = vmatpush1.msra.mxu0 0.0
    %173 = vmatprep.subr.mxu0 0.0
    %174 = vmatpush1.msra.mxu0 0.0
    %175 = vmatprep.subr.mxu0 0.0
    %176 = vmatpush1.msra.mxu0 0.0
    %177 = vmatprep.subr.mxu0 0.0
    %178 = vmatpush1.msra.mxu0 0.0
    %179 = vmatprep.subr.mxu0 0.0
    %180 = vmatpush1.msra.mxu0 0.0
    %181 = vmatprep.subr.mxu0 0.0
    %182 = vmatpush1.msra.mxu0 0.0
    %183 = vmatprep.subr.mxu0 0.0
    %184 = vmatpush1.msra.mxu0 0.0
    %185 = vmatprep.subr.mxu0 0.0
    %186 = vmatpush1.msra.mxu0 0.0
    %187 = vmatprep.subr.mxu0 0.0
    %188 = vmatpush1.msra.mxu0 0.0
    %189 = vmatprep.subr.mxu0 0.0
    %190 = vmatpush1.msra.mxu0 0.0
    %191 = vmatprep.subr.mxu0 0.0
    %192 = vmatpush1.msra.mxu0 0.0
    %193 = vmatprep.subr.mxu0 0.0
    %194 = vmatpush1.msra.mxu0 0.0
    %195 = vmatprep.mubr.f32.mxu0 0.0
    %196 = vmatmul.mubr.f32.gmra.mrb[0].mxu0 %v108
    %v197 = vpop.f32.mrb[0].mxu0
    %v198 = vadd.f32 %v89, %v197
    %v199 = vpop.f32.mrb[0].mxu0
    %v200 = vadd.f32 %v93, %v199
    %201 = vmatprep.mubr.f32.mxu0 0.0
    %202 = vmatmul.mubr.f32.gmra.mrb[0].mxu0 %v111
    %v203 = vpop.f32.mrb[0].mxu0
    %v204 = vadd.f32 %v89, %v203
    %v205 = vpop.f32.mrb[0].mxu0
    %v206 = vadd.f32 %v93, %v205
    %207 = vmatprep.mubr.f32.mxu0 0.0
    %208 = vmatmul.mubr.f32.gmra.mrb[0].mxu0 %v114
    %v209 = vpop.f32.mrb[0].mxu0
    %v210 = vadd.f32 %v89, %v209
    %v211 = vpop.f32.mrb[0].mxu0
    %v212 = vadd.f32 %v93, %v211
    %213 = vmatprep.mubr.f32.mxu0 0.0
    %214 = vmatmul.mubr.f32.gmra.mrb[0].mxu0 %v117
    %v215 = vpop.f32.mrb[0].mxu0
    %v216 = vadd.f32 %v89, %v215
    %v217 = vpop.f32.mrb[0].mxu0
    %v218 = vadd.f32 %v93, %v217
    %219 = vmatprep.mubr.f32.mxu0 0.0
    %220 = vmatmul.mubr.f32.gmra.mrb[0].mxu0 %v120
    %v221 = vpop.f32.mrb[0].mxu0
    %v222 = vadd.f32 %v89, %v221
    %v223 = vpop.f32.mrb[0].mxu0
    %v224 = vadd.f32 %v93, %v223
    %225 = vmatprep.mubr.f32.mxu0 0.0
    %226 = vmatmul.mubr.f32.gmra.mrb[0].mxu0 %v123
    %v227 = vpop.f32.mrb[0].mxu0
    %v228 = vadd.f32 %v89, %v227
    %v229 = vpop.f32.mrb[0].mxu0
    %v230 = vadd.f32 %v93, %v229
    %231 = vmatprep.mubr.f32.mxu0 0.0
    %232 = vmatmul.mubr.f32.gmra.mrb[0].mxu0 %v126
    %v233 = vpop.f32.mrb[0].mxu0
    %v234 = vadd.f32 %v89, %v233
    %v235 = vpop.f32.mrb[0].mxu0
    %v236 = vadd.f32 %v93, %v235
    %237 = vmatprep.mubr.f32.mxu0 0.0
    %238 = vmatmul.mubr.f32.gmra.mrb[0].mxu0 %v129
    %v239 = vpop.f32.mrb[0].mxu0
    %v240 = vadd.f32 %v89, %v239
    %v241 = vpop.f32.mrb[0].mxu0
    %v242 = vadd.f32 %v93, %v241
    %243 = vdwg.mxu0
    %244 = vmatprep.subr.mxu0 %v79
    %245 = vmatpush1.msra.mxu0 %v78
    %246 = vmatprep.subr.mxu0 %v83
    %247 = vmatpush1.msra.mxu0 %v82
    %248 = vmatprep.subr.mxu0 0.0
    %249 = vmatpush1.msra.mxu0 0.0
    %250 = vmatprep.subr.mxu0 0.0
    %251 = vmatpush1.msra.mxu0 0.0
    %252 = vmatprep.subr.mxu0 0.0
    %253 = vmatpush1.msra.mxu0 0.0
    %254 = vmatprep.subr.mxu0 0.0
    %255 = vmatpush1.msra.mxu0 0.0
    %256 = vmatprep.subr.mxu0 0.0
    %257 = vmatpush1.msra.mxu0 0.0
    %258 = vmatprep.subr.mxu0 0.0
    %259 = vmatpush1.msra.mxu0 0.0
    %260 = vmatprep.subr.mxu0 0.0
    %261 = vmatpush1.msra.mxu0 0.0
    %262 = vmatprep.subr.mxu0 0.0
    %263 = vmatpush1.msra.mxu0 0.0
    %264 = vmatprep.subr.mxu0 0.0
    %265 = vmatpush1.msra.mxu0 0.0
    %266 = vmatprep.subr.mxu0 0.0
    %267 = vmatpush1.msra.mxu0 0.0
    %268 = vmatprep.subr.mxu0 0.0
    %269 = vmatpush1.msra.mxu0 0.0
    %270 = vmatprep.subr.mxu0 0.0
    %271 = vmatpush1.msra.mxu0 0.0
    %272 = vmatprep.subr.mxu0 0.0
    %273 = vmatpush1.msra.mxu0 0.0
    %274 = vmatprep.subr.mxu0 0.0
    %275 = vmatpush1.msra.mxu0 0.0
    %276 = vmatprep.subr.mxu0 0.0
    %277 = vmatpush1.msra.mxu0 0.0
    %278 = vmatprep.subr.mxu0 0.0
    %279 = vmatpush1.msra.mxu0 0.0
    %280 = vmatprep.subr.mxu0 0.0
    %281 = vmatpush1.msra.mxu0 0.0
    %282 = vmatprep.subr.mxu0 0.0
    %283 = vmatpush1.msra.mxu0 0.0
    %284 = vmatprep.subr.mxu0 0.0
    %285 = vmatpush1.msra.mxu0 0.0
    %286 = vmatprep.subr.mxu0 0.0
    %287 = vmatpush1.msra.mxu0 0.0
    %288 = vmatprep.subr.mxu0 0.0
    %289 = vmatpush1.msra.mxu0 0.0
    %290 = vmatprep.subr.mxu0 0.0
    %291 = vmatpush1.msra.mxu0 0.0
    %292 = vmatprep.subr.mxu0 0.0
    %293 = vmatpush1.msra.mxu0 0.0
    %294 = vmatprep.subr.mxu0 0.0
    %295 = vmatpush1.msra.mxu0 0.0
    %296 = vmatprep.subr.mxu0 0.0
    %297 = vmatpush1.msra.mxu0 0.0
    %298 = vmatprep.subr.mxu0 0.0
    %299 = vmatpush1.msra.mxu0 0.0
    %300 = vmatprep.subr.mxu0 0.0
    %301 = vmatpush1.msra.mxu0 0.0
    %302 = vmatprep.subr.mxu0 0.0
    %303 = vmatpush1.msra.mxu0 0.0
    %304 = vmatprep.subr.mxu0 0.0
    %305 = vmatpush1.msra.mxu0 0.0
    %306 = vmatprep.subr.mxu0 0.0
    %307 = vmatpush1.msra.mxu0 0.0
    %308 = vmatprep.mubr.f32.mxu0 0.0
    %309 = vmatmul.mubr.f32.gmra.mrb[0].mxu0 %v108
    %v310 = vpop.f32.mrb[0].mxu0
    %v311 = vadd.f32 %v97, %v310
    %v312 = vpop.f32.mrb[0].mxu0
    %v313 = vadd.f32 %v101, %v312
    %314 = vmatprep.mubr.f32.mxu0 0.0
    %315 = vmatmul.mubr.f32.gmra.mrb[0].mxu0 %v111
    %v316 = vpop.f32.mrb[0].mxu0
    %v317 = vadd.f32 %v97, %v316
    %v318 = vpop.f32.mrb[0].mxu0
    %v319 = vadd.f32 %v101, %v318
    %320 = vmatprep.mubr.f32.mxu0 0.0
    %321 = vmatmul.mubr.f32.gmra.mrb[0].mxu0 %v114
    %v322 = vpop.f32.mrb[0].mxu0
    %v323 = vadd.f32 %v97, %v322
    %v324 = vpop.f32.mrb[0].mxu0
    %v325 = vadd.f32 %v101, %v324
    %326 = vmatprep.mubr.f32.mxu0 0.0
    %327 = vmatmul.mubr.f32.gmra.mrb[0].mxu0 %v117
    %v328 = vpop.f32.mrb[0].mxu0
    %v329 = vadd.f32 %v97, %v328
    %v330 = vpop.f32.mrb[0].mxu0
    %v331 = vadd.f32 %v101, %v330
    %332 = vmatprep.mubr.f32.mxu0 0.0
    %333 = vmatmul.mubr.f32.gmra.mrb[0].mxu0 %v120
    %v334 = vpop.f32.mrb[0].mxu0
    %v335 = vadd.f32 %v97, %v334
    %v336 = vpop.f32.mrb[0].mxu0
    %v337 = vadd.f32 %v101, %v336
    %338 = vmatprep.mubr.f32.mxu0 0.0
    %339 = vmatmul.mubr.f32.gmra.mrb[0].mxu0 %v123
    %v340 = vpop.f32.mrb[0].mxu0
    %v341 = vadd.f32 %v97, %v340
    %v342 = vpop.f32.mrb[0].mxu0
    %v343 = vadd.f32 %v101, %v342
    %344 = vmatprep.mubr.f32.mxu0 0.0
    %345 = vmatmul.mubr.f32.gmra.mrb[0].mxu0 %v126
    %v346 = vpop.f32.mrb[0].mxu0
    %v347 = vadd.f32 %v97, %v346
    %v348 = vpop.f32.mrb[0].mxu0
    %v349 = vadd.f32 %v101, %v348
    %350 = vmatprep.mubr.f32.mxu0 0.0
    %351 = vmatmul.mubr.f32.gmra.mrb[0].mxu0 %v129
    %v352 = vpop.f32.mrb[0].mxu0
    %v353 = vadd.f32 %v97, %v352
    %v354 = vpop.f32.mrb[0].mxu0
    %v355 = vadd.f32 %v101, %v354
    %356 = vdwg.mxu0
    %357 = vst [vmem:[#allocation2] sm:$0xff] %v198
    %358 = vst [vmem:[#allocation2 + $0x8] sm:$0xff] %v200
    %359 = vst [vmem:[#allocation2 + $0x10] sm:$0xff] %v311
    %360 = vst [vmem:[#allocation2 + $0x18] sm:$0xff] %v313
    %361 = vst [vmem:[#allocation2 + $0x20] sm:$0xff] %v204
    %362 = vst [vmem:[#allocation2 + $0x28] sm:$0xff] %v206
    %363 = vst [vmem:[#allocation2 + $0x30] sm:$0xff] %v317
    %364 = vst [vmem:[#allocation2 + $0x38] sm:$0xff] %v319
    %365 = vst [vmem:[#allocation2 + $0x40] sm:$0xff] %v210
    %366 = vst [vmem:[#allocation2 + $0x48] sm:$0xff] %v212
    %367 = vst [vmem:[#allocation2 + $0x50] sm:$0xff] %v323
    %368 = vst [vmem:[#allocation2 + $0x58] sm:$0xff] %v325
    %369 = vst [vmem:[#allocation2 + $0x60] sm:$0xff] %v216
    %370 = vst [vmem:[#allocation2 + $0x68] sm:$0xff] %v218
    %371 = vst [vmem:[#allocation2 + $0x70] sm:$0xff] %v329
    %372 = vst [vmem:[#allocation2 + $0x78] sm:$0xff] %v331
    %373 = vst [vmem:[#allocation2 + $0x80] sm:$0xff] %v222
    %374 = vst [vmem:[#allocation2 + $0x88] sm:$0xff] %v224
    %375 = vst [vmem:[#allocation2 + $0x90] sm:$0xff] %v335
    %376 = vst [vmem:[#allocation2 + $0x98] sm:$0xff] %v337
    %377 = vst [vmem:[#allocation2 + $0xa0] sm:$0xff] %v228
    %378 = vst [vmem:[#allocation2 + $0xa8] sm:$0xff] %v230
    %379 = vst [vmem:[#allocation2 + $0xb0] sm:$0xff] %v341
    %380 = vst [vmem:[#allocation2 + $0xb8] sm:$0xff] %v343
    %381 = vst [vmem:[#allocation2 + $0xc0] sm:$0xff] %v234
    %382 = vst [vmem:[#allocation2 + $0xc8] sm:$0xff] %v236
    %383 = vst [vmem:[#allocation2 + $0xd0] sm:$0xff] %v347
    %384 = vst [vmem:[#allocation2 + $0xd8] sm:$0xff] %v349
    %385 = vst [vmem:[#allocation2 + $0xe0] sm:$0xff] %v240
    %386 = vst [vmem:[#allocation2 + $0xe8] sm:$0xff] %v242
    %387 = vst [vmem:[#allocation2 + $0xf0] sm:$0xff] %v353
    %388 = vst [vmem:[#allocation2 + $0xf8] sm:$0xff] %v355
    %v389 = vld [vmem:[#allocation10] sm:$0xff]
    %v390 = vld [vmem:[#allocation10 + $0x8] sm:$0xff]
    %v391 = vld [vmem:[#allocation10 + $0x10] sm:$0xff]
    %v392 = vld [vmem:[#allocation10 + $0x18] sm:$0xff]
    %v393 = vld [vmem:[#allocation10 + $0x20] sm:$0xff]
    %v394 = vld [vmem:[#allocation10 + $0x28] sm:$0xff]
    %v395 = vld [vmem:[#allocation10 + $0x30] sm:$0xff]
    %v396 = vld [vmem:[#allocation10 + $0x38] sm:$0xff]
    %v397 = vld [vmem:[#allocation10 + $0x40] sm:$0xff]
    %v398 = vld [vmem:[#allocation10 + $0x48] sm:$0xff]
    %v399 = vld [vmem:[#allocation10 + $0x50] sm:$0xff]
    %v400 = vld [vmem:[#allocation10 + $0x58] sm:$0xff]
    %v401 = vld [vmem:[#allocation10 + $0x60] sm:$0xff]
    %v402 = vld [vmem:[#allocation10 + $0x68] sm:$0xff]
    %v403 = vld [vmem:[#allocation10 + $0x70] sm:$0xff]
    %v404 = vld [vmem:[#allocation10 + $0x78] sm:$0xff]
    %v405 = vld [vmem:[#allocation10 + $0x80] sm:$0xff]
    %v406 = vld [vmem:[#allocation10 + $0x88] sm:$0xff]
    %v407 = vld [vmem:[#allocation10 + $0x90] sm:$0xff]
    %v408 = vld [vmem:[#allocation10 + $0x98] sm:$0xff]
    %v409 = vld [vmem:[#allocation10 + $0xa0] sm:$0xff]
    %v410 = vld [vmem:[#allocation10 + $0xa8] sm:$0xff]
    %v411 = vld [vmem:[#allocation10 + $0xb0] sm:$0xff]
    %v412 = vld [vmem:[#allocation10 + $0xb8] sm:$0xff]
    %v413 = vld [vmem:[#allocation10 + $0xc0] sm:$0xff]
    %v414 = vld [vmem:[#allocation10 + $0xc8] sm:$0xff]
    %v415 = vld [vmem:[#allocation10 + $0xd0] sm:$0xff]
    %v416 = vld [vmem:[#allocation10 + $0xd8] sm:$0xff]
    %v417 = vld [vmem:[#allocation10 + $0xe0] sm:$0xff]
    %v418 = vld [vmem:[#allocation10 + $0xe8] sm:$0xff]
    %v419 = vld [vmem:[#allocation10 + $0xf0] sm:$0xff]
    %v420 = vld [vmem:[#allocation10 + $0xf8] sm:$0xff]
    %v421 = vld [vmem:[#allocation10 + $0x100] sm:$0xff]
    %v422 = vld [vmem:[#allocation10 + $0x108] sm:$0xff]
    %v423 = vld [vmem:[#allocation10 + $0x110] sm:$0xff]
    %v424 = vld [vmem:[#allocation10 + $0x118] sm:$0xff]
    %v425 = vld [vmem:[#allocation10 + $0x120] sm:$0xff]
    %v426 = vld [vmem:[#allocation10 + $0x128] sm:$0xff]
    %v427 = vld [vmem:[#allocation10 + $0x130] sm:$0xff]
    %v428 = vld [vmem:[#allocation10 + $0x138] sm:$0xff]
    %v429 = vld [vmem:[#allocation10 + $0x140] sm:$0xff]
    %v430 = vld [vmem:[#allocation10 + $0x148] sm:$0xff]
    %v431 = vld [vmem:[#allocation10 + $0x150] sm:$0xff]
    %v432 = vld [vmem:[#allocation10 + $0x158] sm:$0xff]
    %v433 = vld [vmem:[#allocation10 + $0x160] sm:$0xff]
    %v434 = vld [vmem:[#allocation10 + $0x168] sm:$0xff]
    %v435 = vld [vmem:[#allocation10 + $0x170] sm:$0xff]
    %v436 = vld [vmem:[#allocation10 + $0x178] sm:$0xff]
    %v437 = vld [vmem:[#allocation10 + $0x180] sm:$0xff]
    %v438 = vld [vmem:[#allocation10 + $0x188] sm:$0xff]
    %v439 = vld [vmem:[#allocation10 + $0x190] sm:$0xff]
    %v440 = vld [vmem:[#allocation10 + $0x198] sm:$0xff]
    %v441 = vld [vmem:[#allocation10 + $0x1a0] sm:$0xff]
    %v442 = vld [vmem:[#allocation10 + $0x1a8] sm:$0xff]
    %v443 = vld [vmem:[#allocation10 + $0x1b0] sm:$0xff]
    %v444 = vld [vmem:[#allocation10 + $0x1b8] sm:$0xff]
    %v445 = vld [vmem:[#allocation10 + $0x1c0] sm:$0xff]
    %v446 = vld [vmem:[#allocation10 + $0x1c8] sm:$0xff]
    %v447 = vld [vmem:[#allocation10 + $0x1d0] sm:$0xff]
    %v448 = vld [vmem:[#allocation10 + $0x1d8] sm:$0xff]
    %v449 = vld [vmem:[#allocation10 + $0x1e0] sm:$0xff]
    %v450 = vld [vmem:[#allocation10 + $0x1e8] sm:$0xff]
    %v451 = vld [vmem:[#allocation10 + $0x1f0] sm:$0xff]
    %v452 = vld [vmem:[#allocation10 + $0x1f8] sm:$0xff]
    %v453 = vld [vmem:[#allocation3] sm:$0xff]
    %v454 = vld [vmem:[#allocation4] sm:$0xff]
    %v455 = vld [vmem:[#allocation2] sm:$0xff]
    %v456 = vld [vmem:[#allocation2 + $0x8] sm:$0xff]
    %v457 = vld [vmem:[#allocation2 + $0x10] sm:$0xff]
    %v458 = vld [vmem:[#allocation2 + $0x18] sm:$0xff]
    %459 = vmatprep.subr.mxu0 %v390
    %460 = vmatpush1.msra.mxu0 %v389
    %461 = vmatprep.subr.mxu0 %v394
    %462 = vmatpush1.msra.mxu0 %v393
    %463 = vmatprep.subr.mxu0 %v398
    %464 = vmatpush1.msra.mxu0 %v397
    %465 = vmatprep.subr.mxu0 %v402
    %466 = vmatpush1.msra.mxu0 %v401
    %467 = vmatprep.subr.mxu0 %v406
    %468 = vmatpush1.msra.mxu0 %v405
    %469 = vmatprep.subr.mxu0 %v410
    %470 = vmatpush1.msra.mxu0 %v409
    %471 = vmatprep.subr.mxu0 %v414
    %472 = vmatpush1.msra.mxu0 %v413
    %473 = vmatprep.subr.mxu0 %v418
    %474 = vmatpush1.msra.mxu0 %v417
    %475 = vmatprep.subr.mxu0 %v422
    %476 = vmatpush1.msra.mxu0 %v421
    %477 = vmatprep.subr.mxu0 %v426
    %478 = vmatpush1.msra.mxu0 %v425
    %479 = vmatprep.subr.mxu0 %v430
    %480 = vmatpush1.msra.mxu0 %v429
    %481 = vmatprep.subr.mxu0 %v434
    %482 = vmatpush1.msra.mxu0 %v433
    %483 = vmatprep.subr.mxu0 %v438
    %484 = vmatpush1.msra.mxu0 %v437
    %485 = vmatprep.subr.mxu0 %v442
    %486 = vmatpush1.msra.mxu0 %v441
    %487 = vmatprep.subr.mxu0 %v446
    %488 = vmatpush1.msra.mxu0 %v445
    %489 = vmatprep.subr.mxu0 %v450
    %490 = vmatpush1.msra.mxu0 %v449
    %491 = vmatprep.subr.mxu0 0.0
    %492 = vmatpush1.msra.mxu0 0.0
    %493 = vmatprep.subr.mxu0 0.0
    %494 = vmatpush1.msra.mxu0 0.0
    %495 = vmatprep.subr.mxu0 0.0
    %496 = vmatpush1.msra.mxu0 0.0
    %497 = vmatprep.subr.mxu0 0.0
    %498 = vmatpush1.msra.mxu0 0.0
    %499 = vmatprep.subr.mxu0 0.0
    %500 = vmatpush1.msra.mxu0 0.0
    %501 = vmatprep.subr.mxu0 0.0
    %502 = vmatpush1.msra.mxu0 0.0
    %503 = vmatprep.subr.mxu0 0.0
    %504 = vmatpush1.msra.mxu0 0.0
    %505 = vmatprep.subr.mxu0 0.0
    %506 = vmatpush1.msra.mxu0 0.0
    %507 = vmatprep.subr.mxu0 0.0
    %508 = vmatpush1.msra.mxu0 0.0
    %509 = vmatprep.subr.mxu0 0.0
    %510 = vmatpush1.msra.mxu0 0.0
    %511 = vmatprep.subr.mxu0 0.0
    %512 = vmatpush1.msra.mxu0 0.0
    %513 = vmatprep.subr.mxu0 0.0
    %514 = vmatpush1.msra.mxu0 0.0
    %515 = vmatprep.subr.mxu0 0.0
    %516 = vmatpush1.msra.mxu0 0.0
    %517 = vmatprep.subr.mxu0 0.0
    %518 = vmatpush1.msra.mxu0 0.0
    %519 = vmatprep.subr.mxu0 0.0
    %520 = vmatpush1.msra.mxu0 0.0
    %521 = vmatprep.subr.mxu0 0.0
    %522 = vmatpush1.msra.mxu0 0.0
    %523 = vmatprep.mubr.f32.mxu0 0.0
    %524 = vmatmul.mubr.f32.gmra.mrb[0].mxu0 %v453
    %v525 = vpop.f32.mrb[0].mxu0
    %v526 = vadd.f32 0.0, %v525
    %v527 = vpop.f32.mrb[0].mxu0
    %v528 = vadd.f32 0.0, %v527
    %529 = vdwg.mxu0
    %530 = vmatprep.subr.mxu0 %v392
    %531 = vmatpush1.msra.mxu0 %v391
    %532 = vmatprep.subr.mxu0 %v396
    %533 = vmatpush1.msra.mxu0 %v395
    %534 = vmatprep.subr.mxu0 %v400
    %535 = vmatpush1.msra.mxu0 %v399
    %536 = vmatprep.subr.mxu0 %v404
    %537 = vmatpush1.msra.mxu0 %v403
    %538 = vmatprep.subr.mxu0 %v408
    %539 = vmatpush1.msra.mxu0 %v407
    %540 = vmatprep.subr.mxu0 %v412
    %541 = vmatpush1.msra.mxu0 %v411
    %542 = vmatprep.subr.mxu0 %v416
    %543 = vmatpush1.msra.mxu0 %v415
    %544 = vmatprep.subr.mxu0 %v420
    %545 = vmatpush1.msra.mxu0 %v419
    %546 = vmatprep.subr.mxu0 %v424
    %547 = vmatpush1.msra.mxu0 %v423
    %548 = vmatprep.subr.mxu0 %v428
    %549 = vmatpush1.msra.mxu0 %v427
    %550 = vmatprep.subr.mxu0 %v432
    %551 = vmatpush1.msra.mxu0 %v431
    %552 = vmatprep.subr.mxu0 %v436
    %553 = vmatpush1.msra.mxu0 %v435
    %554 = vmatprep.subr.mxu0 %v440
    %555 = vmatpush1.msra.mxu0 %v439
    %556 = vmatprep.subr.mxu0 %v444
    %557 = vmatpush1.msra.mxu0 %v443
    %558 = vmatprep.subr.mxu0 %v448
    %559 = vmatpush1.msra.mxu0 %v447
    %560 = vmatprep.subr.mxu0 %v452
    %561 = vmatpush1.msra.mxu0 %v451
    %562 = vmatprep.subr.mxu0 0.0
    %563 = vmatpush1.msra.mxu0 0.0
    %564 = vmatprep.subr.mxu0 0.0
    %565 = vmatpush1.msra.mxu0 0.0
    %566 = vmatprep.subr.mxu0 0.0
    %567 = vmatpush1.msra.mxu0 0.0
    %568 = vmatprep.subr.mxu0 0.0
    %569 = vmatpush1.msra.mxu0 0.0
    %570 = vmatprep.subr.mxu0 0.0
    %571 = vmatpush1.msra.mxu0 0.0
    %572 = vmatprep.subr.mxu0 0.0
    %573 = vmatpush1.msra.mxu0 0.0
    %574 = vmatprep.subr.mxu0 0.0
    %575 = vmatpush1.msra.mxu0 0.0
    %576 = vmatprep.subr.mxu0 0.0
    %577 = vmatpush1.msra.mxu0 0.0
    %578 = vmatprep.subr.mxu0 0.0
    %579 = vmatpush1.msra.mxu0 0.0
    %580 = vmatprep.subr.mxu0 0.0
    %581 = vmatpush1.msra.mxu0 0.0
    %582 = vmatprep.subr.mxu0 0.0
    %583 = vmatpush1.msra.mxu0 0.0
    %584 = vmatprep.subr.mxu0 0.0
    %585 = vmatpush1.msra.mxu0 0.0
    %586 = vmatprep.subr.mxu0 0.0
    %587 = vmatpush1.msra.mxu0 0.0
    %588 = vmatprep.subr.mxu0 0.0
    %589 = vmatpush1.msra.mxu0 0.0
    %590 = vmatprep.subr.mxu0 0.0
    %591 = vmatpush1.msra.mxu0 0.0
    %592 = vmatprep.subr.mxu0 0.0
    %593 = vmatpush1.msra.mxu0 0.0
    %594 = vmatprep.mubr.f32.mxu0 0.0
    %595 = vmatmul.mubr.f32.gmra.mrb[0].mxu0 %v453
    %v596 = vpop.f32.mrb[0].mxu0
    %v597 = vadd.f32 0.0, %v596
    %v598 = vpop.f32.mrb[0].mxu0
    %v599 = vadd.f32 0.0, %v598
    %600 = vdwg.mxu0
    %v601 = vadd.f32 %v455, %v526
    %v602 = vadd.f32 %v456, %v528
    %v603 = vadd.f32 %v457, %v597
    %v604 = vadd.f32 %v458, %v599
    %v605 = vmul.f32 %v601, 0.5
    %v606 = vtanh.pop %v605
    %v607 = vmul.f32 %v606, 0.5
    %v608 = vadd.f32 %v607, 0.5
    %v609 = vmul.f32 %v602, 0.5
    %v610 = vtanh.pop %v609
    %v611 = vmul.f32 %v610, 0.5
    %v612 = vadd.f32 %v611, 0.5
    %v613 = vtanh.pop %v603
    %v614 = vmul.f32 %v604, 0.5
    %v615 = vtanh.pop %v614
    %v616 = vmul.f32 %v615, 0.5
    %v617 = vadd.f32 %v616, 0.5
    %v618 = vmul.f32 %v612, %v454
    %v619 = vmul.f32 %v608, %v613
    %v620 = vadd.f32 %v618, %v619
    %v621 = vtanh.pop %v620
    %v622 = vmul.f32 %v617, %v621
    %623 = vst [vmem:[#allocation11] sm:$0xff] %v622
    %s624 = smul.u32 0, 8
    %p625 = scmp.eq.s32.totalorder %s624, 7
    // Predicated region
    $region34: #{tpu_custom_call.1} parent=1 // pred_check
      %p626 = pneg %p625
    $region35: #{tpu_custom_call.1} parent=1 // pred_check_branch
      %628 = sbr.rel (%p626) target = $region37
    $region36: #{tpu_custom_call.1} parent=1 // pred_region
      %629 = vst [vmem:[#allocation12] sm:$0xff] %v620
    $region37: #{tpu_custom_call.1} parent=1 // pred_fallthru
      _
    %s630 = scalar_lea.vmem [#allocation2], 32
    %v631 = vld [vmem:[%s630] sm:$0xff]
    %v632 = vld [vmem:[%s630 + $0x8] sm:$0xff]
    %v633 = vld [vmem:[%s630 + $0x10] sm:$0xff]
    %v634 = vld [vmem:[%s630 + $0x18] sm:$0xff]
    %635 = vmatprep.subr.mxu0 %v390
    %636 = vmatpush1.msra.mxu0 %v389
    %637 = vmatprep.subr.mxu0 %v394
    %638 = vmatpush1.msra.mxu0 %v393
    %639 = vmatprep.subr.mxu0 %v398
    %640 = vmatpush1.msra.mxu0 %v397
    %641 = vmatprep.subr.mxu0 %v402
    %642 = vmatpush1.msra.mxu0 %v401
    %643 = vmatprep.subr.mxu0 %v406
    %644 = vmatpush1.msra.mxu0 %v405
    %645 = vmatprep.subr.mxu0 %v410
    %646 = vmatpush1.msra.mxu0 %v409
    %647 = vmatprep.subr.mxu0 %v414
    %648 = vmatpush1.msra.mxu0 %v413
    %649 = vmatprep.subr.mxu0 %v418
    %650 = vmatpush1.msra.mxu0 %v417
    %651 = vmatprep.subr.mxu0 %v422
    %652 = vmatpush1.msra.mxu0 %v421
    %653 = vmatprep.subr.mxu0 %v426
    %654 = vmatpush1.msra.mxu0 %v425
    %655 = vmatprep.subr.mxu0 %v430
    %656 = vmatpush1.msra.mxu0 %v429
    %657 = vmatprep.subr.mxu0 %v434
    %658 = vmatpush1.msra.mxu0 %v433
    %659 = vmatprep.subr.mxu0 %v438
    %660 = vmatpush1.msra.mxu0 %v437
    %661 = vmatprep.subr.mxu0 %v442
    %662 = vmatpush1.msra.mxu0 %v441
    %663 = vmatprep.subr.mxu0 %v446
    %664 = vmatpush1.msra.mxu0 %v445
    %665 = vmatprep.subr.mxu0 %v450
    %666 = vmatpush1.msra.mxu0 %v449
    %667 = vmatprep.subr.mxu0 0.0
    %668 = vmatpush1.msra.mxu0 0.0
    %669 = vmatprep.subr.mxu0 0.0
    %670 = vmatpush1.msra.mxu0 0.0
    %671 = vmatprep.subr.mxu0 0.0
    %672 = vmatpush1.msra.mxu0 0.0
    %673 = vmatprep.subr.mxu0 0.0
    %674 = vmatpush1.msra.mxu0 0.0
    %675 = vmatprep.subr.mxu0 0.0
    %676 = vmatpush1.msra.mxu0 0.0
    %677 = vmatprep.subr.mxu0 0.0
    %678 = vmatpush1.msra.mxu0 0.0
    %679 = vmatprep.subr.mxu0 0.0
    %680 = vmatpush1.msra.mxu0 0.0
    %681 = vmatprep.subr.mxu0 0.0
    %682 = vmatpush1.msra.mxu0 0.0
    %683 = vmatprep.subr.mxu0 0.0
    %684 = vmatpush1.msra.mxu0 0.0
    %685 = vmatprep.subr.mxu0 0.0
    %686 = vmatpush1.msra.mxu0 0.0
    %687 = vmatprep.subr.mxu0 0.0
    %688 = vmatpush1.msra.mxu0 0.0
    %689 = vmatprep.subr.mxu0 0.0
    %690 = vmatpush1.msra.mxu0 0.0
    %691 = vmatprep.subr.mxu0 0.0
    %692 = vmatpush1.msra.mxu0 0.0
    %693 = vmatprep.subr.mxu0 0.0
    %694 = vmatpush1.msra.mxu0 0.0
    %695 = vmatprep.subr.mxu0 0.0
    %696 = vmatpush1.msra.mxu0 0.0
    %697 = vmatprep.subr.mxu0 0.0
    %698 = vmatpush1.msra.mxu0 0.0
    %699 = vmatprep.mubr.f32.mxu0 0.0
    %700 = vmatmul.mubr.f32.gmra.mrb[0].mxu0 %v622
    %v701 = vpop.f32.mrb[0].mxu0
    %v702 = vadd.f32 0.0, %v701
    %v703 = vpop.f32.mrb[0].mxu0
    %v704 = vadd.f32 0.0, %v703
    %705 = vdwg.mxu0
    %706 = vmatprep.subr.mxu0 %v392
    %707 = vmatpush1.msra.mxu0 %v391
    %708 = vmatprep.subr.mxu0 %v396
    %709 = vmatpush1.msra.mxu0 %v395
    %710 = vmatprep.subr.mxu0 %v400
    %711 = vmatpush1.msra.mxu0 %v399
    %712 = vmatprep.subr.mxu0 %v404
    %713 = vmatpush1.msra.mxu0 %v403
    %714 = vmatprep.subr.mxu0 %v408
    %715 = vmatpush1.msra.mxu0 %v407
    %716 = vmatprep.subr.mxu0 %v412
    %717 = vmatpush1.msra.mxu0 %v411
    %718 = vmatprep.subr.mxu0 %v416
    %719 = vmatpush1.msra.mxu0 %v415
    %720 = vmatprep.subr.mxu0 %v420
    %721 = vmatpush1.msra.mxu0 %v419
    %722 = vmatprep.subr.mxu0 %v424
    %723 = vmatpush1.msra.mxu0 %v423
    %724 = vmatprep.subr.mxu0 %v428
    %725 = vmatpush1.msra.mxu0 %v427
    %726 = vmatprep.subr.mxu0 %v432
    %727 = vmatpush1.msra.mxu0 %v431
    %728 = vmatprep.subr.mxu0 %v436
    %729 = vmatpush1.msra.mxu0 %v435
    %730 = vmatprep.subr.mxu0 %v440
    %731 = vmatpush1.msra.mxu0 %v439
    %732 = vmatprep.subr.mxu0 %v444
    %733 = vmatpush1.msra.mxu0 %v443
    %734 = vmatprep.subr.mxu0 %v448
    %735 = vmatpush1.msra.mxu0 %v447
    %736 = vmatprep.subr.mxu0 %v452
    %737 = vmatpush1.msra.mxu0 %v451
    %738 = vmatprep.subr.mxu0 0.0
    %739 = vmatpush1.msra.mxu0 0.0
    %740 = vmatprep.subr.mxu0 0.0
    %741 = vmatpush1.msra.mxu0 0.0
    %742 = vmatprep.subr.mxu0 0.0
    %743 = vmatpush1.msra.mxu0 0.0
    %744 = vmatprep.subr.mxu0 0.0
    %745 = vmatpush1.msra.mxu0 0.0
    %746 = vmatprep.subr.mxu0 0.0
    %747 = vmatpush1.msra.mxu0 0.0
    %748 = vmatprep.subr.mxu0 0.0
    %749 = vmatpush1.msra.mxu0 0.0
    %750 = vmatprep.subr.mxu0 0.0
    %751 = vmatpush1.msra.mxu0 0.0
    %752 = vmatprep.subr.mxu0 0.0
    %753 = vmatpush1.msra.mxu0 0.0
    %754 = vmatprep.subr.mxu0 0.0
    %755 = vmatpush1.msra.mxu0 0.0
    %756 = vmatprep.subr.mxu0 0.0
    %757 = vmatpush1.msra.mxu0 0.0
    %758 = vmatprep.subr.mxu0 0.0
    %759 = vmatpush1.msra.mxu0 0.0
    %760 = vmatprep.subr.mxu0 0.0
    %761 = vmatpush1.msra.mxu0 0.0
    %762 = vmatprep.subr.mxu0 0.0
    %763 = vmatpush1.msra.mxu0 0.0
    %764 = vmatprep.subr.mxu0 0.0
    %765 = vmatpush1.msra.mxu0 0.0
    %766 = vmatprep.subr.mxu0 0.0
    %767 = vmatpush1.msra.mxu0 0.0
    %768 = vmatprep.subr.mxu0 0.0
    %769 = vmatpush1.msra.mxu0 0.0
    %770 = vmatprep.mubr.f32.mxu0 0.0
    %771 = vmatmul.mubr.f32.gmra.mrb[0].mxu0 %v622
    %v772 = vpop.f32.mrb[0].mxu0
    %v773 = vadd.f32 0.0, %v772
    %v774 = vpop.f32.mrb[0].mxu0
    %v775 = vadd.f32 0.0, %v774
    %776 = vdwg.mxu0
    %v777 = vadd.f32 %v631, %v702
    %v778 = vadd.f32 %v632, %v704
    %v779 = vadd.f32 %v633, %v773
    %v780 = vadd.f32 %v634, %v775
    %v781 = vmul.f32 %v777, 0.5
    %v782 = vtanh.pop %v781
    %v783 = vmul.f32 %v782, 0.5
    %v784 = vadd.f32 %v783, 0.5
    %v785 = vmul.f32 %v778, 0.5
    %v786 = vtanh.pop %v785
    %v787 = vmul.f32 %v786, 0.5
    %v788 = vadd.f32 %v787, 0.5
    %v789 = vtanh.pop %v779
    %v790 = vmul.f32 %v780, 0.5
    %v791 = vtanh.pop %v790
    %v792 = vmul.f32 %v791, 0.5
    %v793 = vadd.f32 %v792, 0.5
    %v794 = vmul.f32 %v788, %v620
    %v795 = vmul.f32 %v784, %v789
    %v796 = vadd.f32 %v794, %v795
    %v797 = vtanh.pop %v796
    %v798 = vmul.f32 %v793, %v797
    %s799 = scalar_lea.vmem [#allocation11], 8
    %800 = vst [vmem:[%s799] sm:$0xff] %v798
    %s801 = sadd.s32 %s624, 1
    %p802 = scmp.eq.s32.totalorder %s801, 7
    // Predicated region
    $region38: #{tpu_custom_call.1} parent=1 // pred_check
      %p803 = pneg %p802
    $region39: #{tpu_custom_call.1} parent=1 // pred_check_branch
      %805 = sbr.rel (%p803) target = $region41
    $region40: #{tpu_custom_call.1} parent=1 // pred_region
      %806 = vst [vmem:[#allocation12] sm:$0xff] %v796
    $region41: #{tpu_custom_call.1} parent=1 // pred_fallthru
      _
    %s807 = scalar_lea.vmem [#allocation2], 64
    %v808 = vld [vmem:[%s807] sm:$0xff]
    %v809 = vld [vmem:[%s807 + $0x8] sm:$0xff]
    %v810 = vld [vmem:[%s807 + $0x10] sm:$0xff]
    %v811 = vld [vmem:[%s807 + $0x18] sm:$0xff]
    %812 = vmatprep.subr.mxu0 %v390
    %813 = vmatpush1.msra.mxu0 %v389
    %814 = vmatprep.subr.mxu0 %v394
    %815 = vmatpush1.msra.mxu0 %v393
    %816 = vmatprep.subr.mxu0 %v398
    %817 = vmatpush1.msra.mxu0 %v397
    %818 = vmatprep.subr.mxu0 %v402
    %819 = vmatpush1.msra.mxu0 %v401
    %820 = vmatprep.subr.mxu0 %v406
    %821 = vmatpush1.msra.mxu0 %v405
    %822 = vmatprep.subr.mxu0 %v410
    %823 = vmatpush1.msra.mxu0 %v409
    %824 = vmatprep.subr.mxu0 %v414
    %825 = vmatpush1.msra.mxu0 %v413
    %826 = vmatprep.subr.mxu0 %v418
    %827 = vmatpush1.msra.mxu0 %v417
    %828 = vmatprep.subr.mxu0 %v422
    %829 = vmatpush1.msra.mxu0 %v421
    %830 = vmatprep.subr.mxu0 %v426
    %831 = vmatpush1.msra.mxu0 %v425
    %832 = vmatprep.subr.mxu0 %v430
    %833 = vmatpush1.msra.mxu0 %v429
    %834 = vmatprep.subr.mxu0 %v434
    %835 = vmatpush1.msra.mxu0 %v433
    %836 = vmatprep.subr.mxu0 %v438
    %837 = vmatpush1.msra.mxu0 %v437
    %838 = vmatprep.subr.mxu0 %v442
    %839 = vmatpush1.msra.mxu0 %v441
    %840 = vmatprep.subr.mxu0 %v446
    %841 = vmatpush1.msra.mxu0 %v445
    %842 = vmatprep.subr.mxu0 %v450
    %843 = vmatpush1.msra.mxu0 %v449
    %844 = vmatprep.subr.mxu0 0.0
    %845 = vmatpush1.msra.mxu0 0.0
    %846 = vmatprep.subr.mxu0 0.0
    %847 = vmatpush1.msra.mxu0 0.0
    %848 = vmatprep.subr.mxu0 0.0
    %849 = vmatpush1.msra.mxu0 0.0
    %850 = vmatprep.subr.mxu0 0.0
    %851 = vmatpush1.msra.mxu0 0.0
    %852 = vmatprep.subr.mxu0 0.0
    %853 = vmatpush1.msra.mxu0 0.0
    %854 = vmatprep.subr.mxu0 0.0
    %855 = vmatpush1.msra.mxu0 0.0
    %856 = vmatprep.subr.mxu0 0.0
    %857 = vmatpush1.msra.mxu0 0.0
    %858 = vmatprep.subr.mxu0 0.0
    %859 = vmatpush1.msra.mxu0 0.0
    %860 = vmatprep.subr.mxu0 0.0
    %861 = vmatpush1.msra.mxu0 0.0
    %862 = vmatprep.subr.mxu0 0.0
    %863 = vmatpush1.msra.mxu0 0.0
    %864 = vmatprep.subr.mxu0 0.0
    %865 = vmatpush1.msra.mxu0 0.0
    %866 = vmatprep.subr.mxu0 0.0
    %867 = vmatpush1.msra.mxu0 0.0
    %868 = vmatprep.subr.mxu0 0.0
    %869 = vmatpush1.msra.mxu0 0.0
    %870 = vmatprep.subr.mxu0 0.0
    %871 = vmatpush1.msra.mxu0 0.0
    %872 = vmatprep.subr.mxu0 0.0
    %873 = vmatpush1.msra.mxu0 0.0
    %874 = vmatprep.subr.mxu0 0.0
    %875 = vmatpush1.msra.mxu0 0.0
    %876 = vmatprep.mubr.f32.mxu0 0.0
    %877 = vmatmul.mubr.f32.gmra.mrb[0].mxu0 %v798
    %v878 = vpop.f32.mrb[0].mxu0
    %v879 = vadd.f32 0.0, %v878
    %v880 = vpop.f32.mrb[0].mxu0
    %v881 = vadd.f32 0.0, %v880
    %882 = vdwg.mxu0
    %883 = vmatprep.subr.mxu0 %v392
    %884 = vmatpush1.msra.mxu0 %v391
    %885 = vmatprep.subr.mxu0 %v396
    %886 = vmatpush1.msra.mxu0 %v395
    %887 = vmatprep.subr.mxu0 %v400
    %888 = vmatpush1.msra.mxu0 %v399
    %889 = vmatprep.subr.mxu0 %v404
    %890 = vmatpush1.msra.mxu0 %v403
    %891 = vmatprep.subr.mxu0 %v408
    %892 = vmatpush1.msra.mxu0 %v407
    %893 = vmatprep.subr.mxu0 %v412
    %894 = vmatpush1.msra.mxu0 %v411
    %895 = vmatprep.subr.mxu0 %v416
    %896 = vmatpush1.msra.mxu0 %v415
    %897 = vmatprep.subr.mxu0 %v420
    %898 = vmatpush1.msra.mxu0 %v419
    %899 = vmatprep.subr.mxu0 %v424
    %900 = vmatpush1.msra.mxu0 %v423
    %901 = vmatprep.subr.mxu0 %v428
    %902 = vmatpush1.msra.mxu0 %v427
    %903 = vmatprep.subr.mxu0 %v432
    %904 = vmatpush1.msra.mxu0 %v431
    %905 = vmatprep.subr.mxu0 %v436
    %906 = vmatpush1.msra.mxu0 %v435
    %907 = vmatprep.subr.mxu0 %v440
    %908 = vmatpush1.msra.mxu0 %v439
    %909 = vmatprep.subr.mxu0 %v444
    %910 = vmatpush1.msra.mxu0 %v443
    %911 = vmatprep.subr.mxu0 %v448
    %912 = vmatpush1.msra.mxu0 %v447
    %913 = vmatprep.subr.mxu0 %v452
    %914 = vmatpush1.msra.mxu0 %v451
    %915 = vmatprep.subr.mxu0 0.0
    %916 = vmatpush1.msra.mxu0 0.0
    %917 = vmatprep.subr.mxu0 0.0
    %918 = vmatpush1.msra.mxu0 0.0
    %919 = vmatprep.subr.mxu0 0.0
    %920 = vmatpush1.msra.mxu0 0.0
    %921 = vmatprep.subr.mxu0 0.0
    %922 = vmatpush1.msra.mxu0 0.0
    %923 = vmatprep.subr.mxu0 0.0
    %924 = vmatpush1.msra.mxu0 0.0
    %925 = vmatprep.subr.mxu0 0.0
    %926 = vmatpush1.msra.mxu0 0.0
    %927 = vmatprep.subr.mxu0 0.0
    %928 = vmatpush1.msra.mxu0 0.0
    %929 = vmatprep.subr.mxu0 0.0
    %930 = vmatpush1.msra.mxu0 0.0
    %931 = vmatprep.subr.mxu0 0.0
    %932 = vmatpush1.msra.mxu0 0.0
    %933 = vmatprep.subr.mxu0 0.0
    %934 = vmatpush1.msra.mxu0 0.0
    %935 = vmatprep.subr.mxu0 0.0
    %936 = vmatpush1.msra.mxu0 0.0
    %937 = vmatprep.subr.mxu0 0.0
    %938 = vmatpush1.msra.mxu0 0.0
    %939 = vmatprep.subr.mxu0 0.0
    %940 = vmatpush1.msra.mxu0 0.0
    %941 = vmatprep.subr.mxu0 0.0
    %942 = vmatpush1.msra.mxu0 0.0
    %943 = vmatprep.subr.mxu0 0.0
    %944 = vmatpush1.msra.mxu0 0.0
    %945 = vmatprep.subr.mxu0 0.0
    %946 = vmatpush1.msra.mxu0 0.0
    %947 = vmatprep.mubr.f32.mxu0 0.0
    %948 = vmatmul.mubr.f32.gmra.mrb[0].mxu0 %v798
    %v949 = vpop.f32.mrb[0].mxu0
    %v950 = vadd.f32 0.0, %v949
    %v951 = vpop.f32.mrb[0].mxu0
    %v952 = vadd.f32 0.0, %v951
    %953 = vdwg.mxu0
    %v954 = vadd.f32 %v808, %v879
    %v955 = vadd.f32 %v809, %v881
    %v956 = vadd.f32 %v810, %v950
    %v957 = vadd.f32 %v811, %v952
    %v958 = vmul.f32 %v954, 0.5
    %v959 = vtanh.pop %v958
    %v960 = vmul.f32 %v959, 0.5
    %v961 = vadd.f32 %v960, 0.5
    %v962 = vmul.f32 %v955, 0.5
    %v963 = vtanh.pop %v962
    %v964 = vmul.f32 %v963, 0.5
    %v965 = vadd.f32 %v964, 0.5
    %v966 = vtanh.pop %v956
    %v967 = vmul.f32 %v957, 0.5
    %v968 = vtanh.pop %v967
    %v969 = vmul.f32 %v968, 0.5
    %v970 = vadd.f32 %v969, 0.5
    %v971 = vmul.f32 %v965, %v796
    %v972 = vmul.f32 %v961, %v966
    %v973 = vadd.f32 %v971, %v972
    %v974 = vtanh.pop %v973
    %v975 = vmul.f32 %v970, %v974
    %s976 = scalar_lea.vmem [#allocation11], 16
    %977 = vst [vmem:[%s976] sm:$0xff] %v975
    %s978 = sadd.s32 %s624, 2
    %p979 = scmp.eq.s32.totalorder %s978, 7
    // Predicated region
    $region42: #{tpu_custom_call.1} parent=1 // pred_check
      %p980 = pneg %p979
    $region43: #{tpu_custom_call.1} parent=1 // pred_check_branch
      %982 = sbr.rel (%p980) target = $region45
    $region44: #{tpu_custom_call.1} parent=1 // pred_region
      %983 = vst [vmem:[#allocation12] sm:$0xff] %v973
    $region45: #{tpu_custom_call.1} parent=1 // pred_fallthru
      _
    %s984 = scalar_lea.vmem [#allocation2], 96
    %v985 = vld [vmem:[%s984] sm:$0xff]
    %v986 = vld [vmem:[%s984 + $0x8] sm:$0xff]
    %v987 = vld [vmem:[%s984 + $0x10] sm:$0xff]
    %v988 = vld [vmem:[%s984 + $0x18] sm:$0xff]
    %989 = vmatprep.subr.mxu0 %v390
    %990 = vmatpush1.msra.mxu0 %v389
    %991 = vmatprep.subr.mxu0 %v394
    %992 = vmatpush1.msra.mxu0 %v393
    %993 = vmatprep.subr.mxu0 %v398
    %994 = vmatpush1.msra.mxu0 %v397
    %995 = vmatprep.subr.mxu0 %v402
    %996 = vmatpush1.msra.mxu0 %v401
    %997 = vmatprep.subr.mxu0 %v406
    %998 = vmatpush1.msra.mxu0 %v405
    %999 = vmatprep.subr.mxu0 %v410
    %1000 = vmatpush1.msra.mxu0 %v409
    %1001 = vmatprep.subr.mxu0 %v414
    %1002 = vmatpush1.msra.mxu0 %v413
    %1003 = vmatprep.subr.mxu0 %v418
    %1004 = vmatpush1.msra.mxu0 %v417
    %1005 = vmatprep.subr.mxu0 %v422
    %1006 = vmatpush1.msra.mxu0 %v421
    %1007 = vmatprep.subr.mxu0 %v426
    %1008 = vmatpush1.msra.mxu0 %v425
    %1009 = vmatprep.subr.mxu0 %v430
    %1010 = vmatpush1.msra.mxu0 %v429
    %1011 = vmatprep.subr.mxu0 %v434
    %1012 = vmatpush1.msra.mxu0 %v433
    %1013 = vmatprep.subr.mxu0 %v438
    %1014 = vmatpush1.msra.mxu0 %v437
    %1015 = vmatprep.subr.mxu0 %v442
    %1016 = vmatpush1.msra.mxu0 %v441
    %1017 = vmatprep.subr.mxu0 %v446
    %1018 = vmatpush1.msra.mxu0 %v445
    %1019 = vmatprep.subr.mxu0 %v450
    %1020 = vmatpush1.msra.mxu0 %v449
    %1021 = vmatprep.subr.mxu0 0.0
    %1022 = vmatpush1.msra.mxu0 0.0
    %1023 = vmatprep.subr.mxu0 0.0
    %1024 = vmatpush1.msra.mxu0 0.0
    %1025 = vmatprep.subr.mxu0 0.0
    %1026 = vmatpush1.msra.mxu0 0.0
    %1027 = vmatprep.subr.mxu0 0.0
    %1028 = vmatpush1.msra.mxu0 0.0
    %1029 = vmatprep.subr.mxu0 0.0
    %1030 = vmatpush1.msra.mxu0 0.0
    %1031 = vmatprep.subr.mxu0 0.0
    %1032 = vmatpush1.msra.mxu0 0.0
    %1033 = vmatprep.subr.mxu0 0.0
    %1034 = vmatpush1.msra.mxu0 0.0
    %1035 = vmatprep.subr.mxu0 0.0
    %1036 = vmatpush1.msra.mxu0 0.0
    %1037 = vmatprep.subr.mxu0 0.0
    %1038 = vmatpush1.msra.mxu0 0.0
    %1039 = vmatprep.subr.mxu0 0.0
    %1040 = vmatpush1.msra.mxu0 0.0
    %1041 = vmatprep.subr.mxu0 0.0
    %1042 = vmatpush1.msra.mxu0 0.0
    %1043 = vmatprep.subr.mxu0 0.0
    %1044 = vmatpush1.msra.mxu0 0.0
    %1045 = vmatprep.subr.mxu0 0.0
    %1046 = vmatpush1.msra.mxu0 0.0
    %1047 = vmatprep.subr.mxu0 0.0
    %1048 = vmatpush1.msra.mxu0 0.0
    %1049 = vmatprep.subr.mxu0 0.0
    %1050 = vmatpush1.msra.mxu0 0.0
    %1051 = vmatprep.subr.mxu0 0.0
    %1052 = vmatpush1.msra.mxu0 0.0
    %1053 = vmatprep.mubr.f32.mxu0 0.0
    %1054 = vmatmul.mubr.f32.gmra.mrb[0].mxu0 %v975
    %v1055 = vpop.f32.mrb[0].mxu0
    %v1056 = vadd.f32 0.0, %v1055
    %v1057 = vpop.f32.mrb[0].mxu0
    %v1058 = vadd.f32 0.0, %v1057
    %1059 = vdwg.mxu0
    %1060 = vmatprep.subr.mxu0 %v392
    %1061 = vmatpush1.msra.mxu0 %v391
    %1062 = vmatprep.subr.mxu0 %v396
    %1063 = vmatpush1.msra.mxu0 %v395
    %1064 = vmatprep.subr.mxu0 %v400
    %1065 = vmatpush1.msra.mxu0 %v399
    %1066 = vmatprep.subr.mxu0 %v404
    %1067 = vmatpush1.msra.mxu0 %v403
    %1068 = vmatprep.subr.mxu0 %v408
    %1069 = vmatpush1.msra.mxu0 %v407
    %1070 = vmatprep.subr.mxu0 %v412
    %1071 = vmatpush1.msra.mxu0 %v411
    %1072 = vmatprep.subr.mxu0 %v416
    %1073 = vmatpush1.msra.mxu0 %v415
    %1074 = vmatprep.subr.mxu0 %v420
    %1075 = vmatpush1.msra.mxu0 %v419
    %1076 = vmatprep.subr.mxu0 %v424
    %1077 = vmatpush1.msra.mxu0 %v423
    %1078 = vmatprep.subr.mxu0 %v428
    %1079 = vmatpush1.msra.mxu0 %v427
    %1080 = vmatprep.subr.mxu0 %v432
    %1081 = vmatpush1.msra.mxu0 %v431
    %1082 = vmatprep.subr.mxu0 %v436
    %1083 = vmatpush1.msra.mxu0 %v435
    %1084 = vmatprep.subr.mxu0 %v440
    %1085 = vmatpush1.msra.mxu0 %v439
    %1086 = vmatprep.subr.mxu0 %v444
    %1087 = vmatpush1.msra.mxu0 %v443
    %1088 = vmatprep.subr.mxu0 %v448
    %1089 = vmatpush1.msra.mxu0 %v447
    %1090 = vmatprep.subr.mxu0 %v452
    %1091 = vmatpush1.msra.mxu0 %v451
    %1092 = vmatprep.subr.mxu0 0.0
    %1093 = vmatpush1.msra.mxu0 0.0
    %1094 = vmatprep.subr.mxu0 0.0
    %1095 = vmatpush1.msra.mxu0 0.0
    %1096 = vmatprep.subr.mxu0 0.0
    %1097 = vmatpush1.msra.mxu0 0.0
    %1098 = vmatprep.subr.mxu0 0.0
    %1099 = vmatpush1.msra.mxu0 0.0
    %1100 = vmatprep.subr.mxu0 0.0
    %1101 = vmatpush1.msra.mxu0 0.0
    %1102 = vmatprep.subr.mxu0 0.0
    %1103 = vmatpush1.msra.mxu0 0.0
    %1104 = vmatprep.subr.mxu0 0.0
    %1105 = vmatpush1.msra.mxu0 0.0
    %1106 = vmatprep.subr.mxu0 0.0
    %1107 = vmatpush1.msra.mxu0 0.0
    %1108 = vmatprep.subr.mxu0 0.0
    %1109 = vmatpush1.msra.mxu0 0.0
    %1110 = vmatprep.subr.mxu0 0.0
    %1111 = vmatpush1.msra.mxu0 0.0
    %1112 = vmatprep.subr.mxu0 0.0
    %1113 = vmatpush1.msra.mxu0 0.0
    %1114 = vmatprep.subr.mxu0 0.0
    %1115 = vmatpush1.msra.mxu0 0.0
    %1116 = vmatprep.subr.mxu0 0.0
    %1117 = vmatpush1.msra.mxu0 0.0
    %1118 = vmatprep.subr.mxu0 0.0
    %1119 = vmatpush1.msra.mxu0 0.0
    %1120 = vmatprep.subr.mxu0 0.0
    %1121 = vmatpush1.msra.mxu0 0.0
    %1122 = vmatprep.subr.mxu0 0.0
    %1123 = vmatpush1.msra.mxu0 0.0
    %1124 = vmatprep.mubr.f32.mxu0 0.0
    %1125 = vmatmul.mubr.f32.gmra.mrb[0].mxu0 %v975
    %v1126 = vpop.f32.mrb[0].mxu0
    %v1127 = vadd.f32 0.0, %v1126
    %v1128 = vpop.f32.mrb[0].mxu0
    %v1129 = vadd.f32 0.0, %v1128
    %1130 = vdwg.mxu0
    %v1131 = vadd.f32 %v985, %v1056
    %v1132 = vadd.f32 %v986, %v1058
    %v1133 = vadd.f32 %v987, %v1127
    %v1134 = vadd.f32 %v988, %v1129
    %v1135 = vmul.f32 %v1131, 0.5
    %v1136 = vtanh.pop %v1135
    %v1137 = vmul.f32 %v1136, 0.5
    %v1138 = vadd.f32 %v1137, 0.5
    %v1139 = vmul.f32 %v1132, 0.5
    %v1140 = vtanh.pop %v1139
    %v1141 = vmul.f32 %v1140, 0.5
    %v1142 = vadd.f32 %v1141, 0.5
    %v1143 = vtanh.pop %v1133
    %v1144 = vmul.f32 %v1134, 0.5
    %v1145 = vtanh.pop %v1144
    %v1146 = vmul.f32 %v1145, 0.5
    %v1147 = vadd.f32 %v1146, 0.5
    %v1148 = vmul.f32 %v1142, %v973
    %v1149 = vmul.f32 %v1138, %v1143
    %v1150 = vadd.f32 %v1148, %v1149
    %v1151 = vtanh.pop %v1150
    %v1152 = vmul.f32 %v1147, %v1151
    %s1153 = scalar_lea.vmem [#allocation11], 24
    %1154 = vst [vmem:[%s1153] sm:$0xff] %v1152
    %s1155 = sadd.s32 %s624, 3
    %p1156 = scmp.eq.s32.totalorder %s1155, 7
    // Predicated region
    $region46: #{tpu_custom_call.1} parent=1 // pred_check
      %p1157 = pneg %p1156
    $region47: #{tpu_custom_call.1} parent=1 // pred_check_branch
      %1159 = sbr.rel (%p1157) target = $region49
    $region48: #{tpu_custom_call.1} parent=1 // pred_region
      %1160 = vst [vmem:[#allocation12] sm:$0xff] %v1150
    $region49: #{tpu_custom_call.1} parent=1 // pred_fallthru
      _
    %s1161 = scalar_lea.vmem [#allocation2], 128
    %v1162 = vld [vmem:[%s1161] sm:$0xff]
    %v1163 = vld [vmem:[%s1161 + $0x8] sm:$0xff]
    %v1164 = vld [vmem:[%s1161 + $0x10] sm:$0xff]
    %v1165 = vld [vmem:[%s1161 + $0x18] sm:$0xff]
    %1166 = vmatprep.subr.mxu0 %v390
    %1167 = vmatpush1.msra.mxu0 %v389
    %1168 = vmatprep.subr.mxu0 %v394
    %1169 = vmatpush1.msra.mxu0 %v393
    %1170 = vmatprep.subr.mxu0 %v398
    %1171 = vmatpush1.msra.mxu0 %v397
    %1172 = vmatprep.subr.mxu0 %v402
    %1173 = vmatpush1.msra.mxu0 %v401
    %1174 = vmatprep.subr.mxu0 %v406
    %1175 = vmatpush1.msra.mxu0 %v405
    %1176 = vmatprep.subr.mxu0 %v410
    %1177 = vmatpush1.msra.mxu0 %v409
    %1178 = vmatprep.subr.mxu0 %v414
    %1179 = vmatpush1.msra.mxu0 %v413
    %1180 = vmatprep.subr.mxu0 %v418
    %1181 = vmatpush1.msra.mxu0 %v417
    %1182 = vmatprep.subr.mxu0 %v422
    %1183 = vmatpush1.msra.mxu0 %v421
    %1184 = vmatprep.subr.mxu0 %v426
    %1185 = vmatpush1.msra.mxu0 %v425
    %1186 = vmatprep.subr.mxu0 %v430
    %1187 = vmatpush1.msra.mxu0 %v429
    %1188 = vmatprep.subr.mxu0 %v434
    %1189 = vmatpush1.msra.mxu0 %v433
    %1190 = vmatprep.subr.mxu0 %v438
    %1191 = vmatpush1.msra.mxu0 %v437
    %1192 = vmatprep.subr.mxu0 %v442
    %1193 = vmatpush1.msra.mxu0 %v441
    %1194 = vmatprep.subr.mxu0 %v446
    %1195 = vmatpush1.msra.mxu0 %v445
    %1196 = vmatprep.subr.mxu0 %v450
    %1197 = vmatpush1.msra.mxu0 %v449
    %1198 = vmatprep.subr.mxu0 0.0
    %1199 = vmatpush1.msra.mxu0 0.0
    %1200 = vmatprep.subr.mxu0 0.0
    %1201 = vmatpush1.msra.mxu0 0.0
    %1202 = vmatprep.subr.mxu0 0.0
    %1203 = vmatpush1.msra.mxu0 0.0
    %1204 = vmatprep.subr.mxu0 0.0
    %1205 = vmatpush1.msra.mxu0 0.0
    %1206 = vmatprep.subr.mxu0 0.0
    %1207 = vmatpush1.msra.mxu0 0.0
    %1208 = vmatprep.subr.mxu0 0.0
    %1209 = vmatpush1.msra.mxu0 0.0
    %1210 = vmatprep.subr.mxu0 0.0
    %1211 = vmatpush1.msra.mxu0 0.0
    %1212 = vmatprep.subr.mxu0 0.0
    %1213 = vmatpush1.msra.mxu0 0.0
    %1214 = vmatprep.subr.mxu0 0.0
    %1215 = vmatpush1.msra.mxu0 0.0
    %1216 = vmatprep.subr.mxu0 0.0
    %1217 = vmatpush1.msra.mxu0 0.0
    %1218 = vmatprep.subr.mxu0 0.0
    %1219 = vmatpush1.msra.mxu0 0.0
    %1220 = vmatprep.subr.mxu0 0.0
    %1221 = vmatpush1.msra.mxu0 0.0
    %1222 = vmatprep.subr.mxu0 0.0
    %1223 = vmatpush1.msra.mxu0 0.0
    %1224 = vmatprep.subr.mxu0 0.0
    %1225 = vmatpush1.msra.mxu0 0.0
    %1226 = vmatprep.subr.mxu0 0.0
    %1227 = vmatpush1.msra.mxu0 0.0
    %1228 = vmatprep.subr.mxu0 0.0
    %1229 = vmatpush1.msra.mxu0 0.0
    %1230 = vmatprep.mubr.f32.mxu0 0.0
    %1231 = vmatmul.mubr.f32.gmra.mrb[0].mxu0 %v1152
    %v1232 = vpop.f32.mrb[0].mxu0
    %v1233 = vadd.f32 0.0, %v1232
    %v1234 = vpop.f32.mrb[0].mxu0
    %v1235 = vadd.f32 0.0, %v1234
    %1236 = vdwg.mxu0
    %1237 = vmatprep.subr.mxu0 %v392
    %1238 = vmatpush1.msra.mxu0 %v391
    %1239 = vmatprep.subr.mxu0 %v396
    %1240 = vmatpush1.msra.mxu0 %v395
    %1241 = vmatprep.subr.mxu0 %v400
    %1242 = vmatpush1.msra.mxu0 %v399
    %1243 = vmatprep.subr.mxu0 %v404
    %1244 = vmatpush1.msra.mxu0 %v403
    %1245 = vmatprep.subr.mxu0 %v408
    %1246 = vmatpush1.msra.mxu0 %v407
    %1247 = vmatprep.subr.mxu0 %v412
    %1248 = vmatpush1.msra.mxu0 %v411
    %1249 = vmatprep.subr.mxu0 %v416
    %1250 = vmatpush1.msra.mxu0 %v415
    %1251 = vmatprep.subr.mxu0 %v420
    %1252 = vmatpush1.msra.mxu0 %v419
    %1253 = vmatprep.subr.mxu0 %v424
    %1254 = vmatpush1.msra.mxu0 %v423
    %1255 = vmatprep.subr.mxu0 %v428
    %1256 = vmatpush1.msra.mxu0 %v427
    %1257 = vmatprep.subr.mxu0 %v432
    %1258 = vmatpush1.msra.mxu0 %v431
    %1259 = vmatprep.subr.mxu0 %v436
    %1260 = vmatpush1.msra.mxu0 %v435
    %1261 = vmatprep.subr.mxu0 %v440
    %1262 = vmatpush1.msra.mxu0 %v439
    %1263 = vmatprep.subr.mxu0 %v444
    %1264 = vmatpush1.msra.mxu0 %v443
    %1265 = vmatprep.subr.mxu0 %v448
    %1266 = vmatpush1.msra.mxu0 %v447
    %1267 = vmatprep.subr.mxu0 %v452
    %1268 = vmatpush1.msra.mxu0 %v451
    %1269 = vmatprep.subr.mxu0 0.0
    %1270 = vmatpush1.msra.mxu0 0.0
    %1271 = vmatprep.subr.mxu0 0.0
    %1272 = vmatpush1.msra.mxu0 0.0
    %1273 = vmatprep.subr.mxu0 0.0
    %1274 = vmatpush1.msra.mxu0 0.0
    %1275 = vmatprep.subr.mxu0 0.0
    %1276 = vmatpush1.msra.mxu0 0.0
    %1277 = vmatprep.subr.mxu0 0.0
    %1278 = vmatpush1.msra.mxu0 0.0
    %1279 = vmatprep.subr.mxu0 0.0
    %1280 = vmatpush1.msra.mxu0 0.0
    %1281 = vmatprep.subr.mxu0 0.0
    %1282 = vmatpush1.msra.mxu0 0.0
    %1283 = vmatprep.subr.mxu0 0.0
    %1284 = vmatpush1.msra.mxu0 0.0
    %1285 = vmatprep.subr.mxu0 0.0
    %1286 = vmatpush1.msra.mxu0 0.0
    %1287 = vmatprep.subr.mxu0 0.0
    %1288 = vmatpush1.msra.mxu0 0.0
    %1289 = vmatprep.subr.mxu0 0.0
    %1290 = vmatpush1.msra.mxu0 0.0
    %1291 = vmatprep.subr.mxu0 0.0
    %1292 = vmatpush1.msra.mxu0 0.0
    %1293 = vmatprep.subr.mxu0 0.0
    %1294 = vmatpush1.msra.mxu0 0.0
    %1295 = vmatprep.subr.mxu0 0.0
    %1296 = vmatpush1.msra.mxu0 0.0
    %1297 = vmatprep.subr.mxu0 0.0
    %1298 = vmatpush1.msra.mxu0 0.0
    %1299 = vmatprep.subr.mxu0 0.0
    %1300 = vmatpush1.msra.mxu0 0.0
    %1301 = vmatprep.mubr.f32.mxu0 0.0
    %1302 = vmatmul.mubr.f32.gmra.mrb[0].mxu0 %v1152
    %v1303 = vpop.f32.mrb[0].mxu0
    %v1304 = vadd.f32 0.0, %v1303
    %v1305 = vpop.f32.mrb[0].mxu0
    %v1306 = vadd.f32 0.0, %v1305
    %1307 = vdwg.mxu0
    %v1308 = vadd.f32 %v1162, %v1233
    %v1309 = vadd.f32 %v1163, %v1235
    %v1310 = vadd.f32 %v1164, %v1304
    %v1311 = vadd.f32 %v1165, %v1306
    %v1312 = vmul.f32 %v1308, 0.5
    %v1313 = vtanh.pop %v1312
    %v1314 = vmul.f32 %v1313, 0.5
    %v1315 = vadd.f32 %v1314, 0.5
    %v1316 = vmul.f32 %v1309, 0.5
    %v1317 = vtanh.pop %v1316
    %v1318 = vmul.f32 %v1317, 0.5
    %v1319 = vadd.f32 %v1318, 0.5
    %v1320 = vtanh.pop %v1310
    %v1321 = vmul.f32 %v1311, 0.5
    %v1322 = vtanh.pop %v1321
    %v1323 = vmul.f32 %v1322, 0.5
    %v1324 = vadd.f32 %v1323, 0.5
    %v1325 = vmul.f32 %v1319, %v1150
    %v1326 = vmul.f32 %v1315, %v1320
    %v1327 = vadd.f32 %v1325, %v1326
    %v1328 = vtanh.pop %v1327
    %v1329 = vmul.f32 %v1324, %v1328
    %s1330 = scalar_lea.vmem [#allocation11], 32
    %1331 = vst [vmem:[%s1330] sm:$0xff] %v1329
    %s1332 = sadd.s32 %s624, 4
    %p1333 = scmp.eq.s32.totalorder %s1332, 7
    // Predicated region
    $region50: #{tpu_custom_call.1} parent=1 // pred_check
      %p1334 = pneg %p1333
    $region51: #{tpu_custom_call.1} parent=1 // pred_check_branch
      %1336 = sbr.rel (%p1334) target = $region53
    $region52: #{tpu_custom_call.1} parent=1 // pred_region
      %1337 = vst [vmem:[#allocation12] sm:$0xff] %v1327
    $region53: #{tpu_custom_call.1} parent=1 // pred_fallthru
      _
    %s1338 = scalar_lea.vmem [#allocation2], 160
    %v1339 = vld [vmem:[%s1338] sm:$0xff]
    %v1340 = vld [vmem:[%s1338 + $0x8] sm:$0xff]
    %v1341 = vld [vmem:[%s1338 + $0x10] sm:$0xff]
    %v1342 = vld [vmem:[%s1338 + $0x18] sm:$0xff]
    %1343 = vmatprep.subr.mxu0 %v390
    %1344 = vmatpush1.msra.mxu0 %v389
    %1345 = vmatprep.subr.mxu0 %v394
    %1346 = vmatpush1.msra.mxu0 %v393
    %1347 = vmatprep.subr.mxu0 %v398
    %1348 = vmatpush1.msra.mxu0 %v397
    %1349 = vmatprep.subr.mxu0 %v402
    %1350 = vmatpush1.msra.mxu0 %v401
    %1351 = vmatprep.subr.mxu0 %v406
    %1352 = vmatpush1.msra.mxu0 %v405
    %1353 = vmatprep.subr.mxu0 %v410
    %1354 = vmatpush1.msra.mxu0 %v409
    %1355 = vmatprep.subr.mxu0 %v414
    %1356 = vmatpush1.msra.mxu0 %v413
    %1357 = vmatprep.subr.mxu0 %v418
    %1358 = vmatpush1.msra.mxu0 %v417
    %1359 = vmatprep.subr.mxu0 %v422
    %1360 = vmatpush1.msra.mxu0 %v421
    %1361 = vmatprep.subr.mxu0 %v426
    %1362 = vmatpush1.msra.mxu0 %v425
    %1363 = vmatprep.subr.mxu0 %v430
    %1364 = vmatpush1.msra.mxu0 %v429
    %1365 = vmatprep.subr.mxu0 %v434
    %1366 = vmatpush1.msra.mxu0 %v433
    %1367 = vmatprep.subr.mxu0 %v438
    %1368 = vmatpush1.msra.mxu0 %v437
    %1369 = vmatprep.subr.mxu0 %v442
    %1370 = vmatpush1.msra.mxu0 %v441
    %1371 = vmatprep.subr.mxu0 %v446
    %1372 = vmatpush1.msra.mxu0 %v445
    %1373 = vmatprep.subr.mxu0 %v450
    %1374 = vmatpush1.msra.mxu0 %v449
    %1375 = vmatprep.subr.mxu0 0.0
    %1376 = vmatpush1.msra.mxu0 0.0
    %1377 = vmatprep.subr.mxu0 0.0
    %1378 = vmatpush1.msra.mxu0 0.0
    %1379 = vmatprep.subr.mxu0 0.0
    %1380 = vmatpush1.msra.mxu0 0.0
    %1381 = vmatprep.subr.mxu0 0.0
    %1382 = vmatpush1.msra.mxu0 0.0
    %1383 = vmatprep.subr.mxu0 0.0
    %1384 = vmatpush1.msra.mxu0 0.0
    %1385 = vmatprep.subr.mxu0 0.0
    %1386 = vmatpush1.msra.mxu0 0.0
    %1387 = vmatprep.subr.mxu0 0.0
    %1388 = vmatpush1.msra.mxu0 0.0
    %1389 = vmatprep.subr.mxu0 0.0
    %1390 = vmatpush1.msra.mxu0 0.0
    %1391 = vmatprep.subr.mxu0 0.0
    %1392 = vmatpush1.msra.mxu0 0.0
    %1393 = vmatprep.subr.mxu0 0.0
    %1394 = vmatpush1.msra.mxu0 0.0
    %1395 = vmatprep.subr.mxu0 0.0
    %1396 = vmatpush1.msra.mxu0 0.0
    %1397 = vmatprep.subr.mxu0 0.0
    %1398 = vmatpush1.msra.mxu0 0.0
    %1399 = vmatprep.subr.mxu0 0.0
    %1400 = vmatpush1.msra.mxu0 0.0
    %1401 = vmatprep.subr.mxu0 0.0
    %1402 = vmatpush1.msra.mxu0 0.0
    %1403 = vmatprep.subr.mxu0 0.0
    %1404 = vmatpush1.msra.mxu0 0.0
    %1405 = vmatprep.subr.mxu0 0.0
    %1406 = vmatpush1.msra.mxu0 0.0
    %1407 = vmatprep.mubr.f32.mxu0 0.0
    %1408 = vmatmul.mubr.f32.gmra.mrb[0].mxu0 %v1329
    %v1409 = vpop.f32.mrb[0].mxu0
    %v1410 = vadd.f32 0.0, %v1409
    %v1411 = vpop.f32.mrb[0].mxu0
    %v1412 = vadd.f32 0.0, %v1411
    %1413 = vdwg.mxu0
    %1414 = vmatprep.subr.mxu0 %v392
    %1415 = vmatpush1.msra.mxu0 %v391
    %1416 = vmatprep.subr.mxu0 %v396
    %1417 = vmatpush1.msra.mxu0 %v395
    %1418 = vmatprep.subr.mxu0 %v400
    %1419 = vmatpush1.msra.mxu0 %v399
    %1420 = vmatprep.subr.mxu0 %v404
    %1421 = vmatpush1.msra.mxu0 %v403
    %1422 = vmatprep.subr.mxu0 %v408
    %1423 = vmatpush1.msra.mxu0 %v407
    %1424 = vmatprep.subr.mxu0 %v412
    %1425 = vmatpush1.msra.mxu0 %v411
    %1426 = vmatprep.subr.mxu0 %v416
    %1427 = vmatpush1.msra.mxu0 %v415
    %1428 = vmatprep.subr.mxu0 %v420
    %1429 = vmatpush1.msra.mxu0 %v419
    %1430 = vmatprep.subr.mxu0 %v424
    %1431 = vmatpush1.msra.mxu0 %v423
    %1432 = vmatprep.subr.mxu0 %v428
    %1433 = vmatpush1.msra.mxu0 %v427
    %1434 = vmatprep.subr.mxu0 %v432
    %1435 = vmatpush1.msra.mxu0 %v431
    %1436 = vmatprep.subr.mxu0 %v436
    %1437 = vmatpush1.msra.mxu0 %v435
    %1438 = vmatprep.subr.mxu0 %v440
    %1439 = vmatpush1.msra.mxu0 %v439
    %1440 = vmatprep.subr.mxu0 %v444
    %1441 = vmatpush1.msra.mxu0 %v443
    %1442 = vmatprep.subr.mxu0 %v448
    %1443 = vmatpush1.msra.mxu0 %v447
    %1444 = vmatprep.subr.mxu0 %v452
    %1445 = vmatpush1.msra.mxu0 %v451
    %1446 = vmatprep.subr.mxu0 0.0
    %1447 = vmatpush1.msra.mxu0 0.0
    %1448 = vmatprep.subr.mxu0 0.0
    %1449 = vmatpush1.msra.mxu0 0.0
    %1450 = vmatprep.subr.mxu0 0.0
    %1451 = vmatpush1.msra.mxu0 0.0
    %1452 = vmatprep.subr.mxu0 0.0
    %1453 = vmatpush1.msra.mxu0 0.0
    %1454 = vmatprep.subr.mxu0 0.0
    %1455 = vmatpush1.msra.mxu0 0.0
    %1456 = vmatprep.subr.mxu0 0.0
    %1457 = vmatpush1.msra.mxu0 0.0
    %1458 = vmatprep.subr.mxu0 0.0
    %1459 = vmatpush1.msra.mxu0 0.0
    %1460 = vmatprep.subr.mxu0 0.0
    %1461 = vmatpush1.msra.mxu0 0.0
    %1462 = vmatprep.subr.mxu0 0.0
    %1463 = vmatpush1.msra.mxu0 0.0
    %1464 = vmatprep.subr.mxu0 0.0
    %1465 = vmatpush1.msra.mxu0 0.0
    %1466 = vmatprep.subr.mxu0 0.0
    %1467 = vmatpush1.msra.mxu0 0.0
    %1468 = vmatprep.subr.mxu0 0.0
    %1469 = vmatpush1.msra.mxu0 0.0
    %1470 = vmatprep.subr.mxu0 0.0
    %1471 = vmatpush1.msra.mxu0 0.0
    %1472 = vmatprep.subr.mxu0 0.0
    %1473 = vmatpush1.msra.mxu0 0.0
    %1474 = vmatprep.subr.mxu0 0.0
    %1475 = vmatpush1.msra.mxu0 0.0
    %1476 = vmatprep.subr.mxu0 0.0
    %1477 = vmatpush1.msra.mxu0 0.0
    %1478 = vmatprep.mubr.f32.mxu0 0.0
    %1479 = vmatmul.mubr.f32.gmra.mrb[0].mxu0 %v1329
    %v1480 = vpop.f32.mrb[0].mxu0
    %v1481 = vadd.f32 0.0, %v1480
    %v1482 = vpop.f32.mrb[0].mxu0
    %v1483 = vadd.f32 0.0, %v1482
    %1484 = vdwg.mxu0
    %v1485 = vadd.f32 %v1339, %v1410
    %v1486 = vadd.f32 %v1340, %v1412
    %v1487 = vadd.f32 %v1341, %v1481
    %v1488 = vadd.f32 %v1342, %v1483
    %v1489 = vmul.f32 %v1485, 0.5
    %v1490 = vtanh.pop %v1489
    %v1491 = vmul.f32 %v1490, 0.5
    %v1492 = vadd.f32 %v1491, 0.5
    %v1493 = vmul.f32 %v1486, 0.5
    %v1494 = vtanh.pop %v1493
    %v1495 = vmul.f32 %v1494, 0.5
    %v1496 = vadd.f32 %v1495, 0.5
    %v1497 = vtanh.pop %v1487
    %v1498 = vmul.f32 %v1488, 0.5
    %v1499 = vtanh.pop %v1498
    %v1500 = vmul.f32 %v1499, 0.5
    %v1501 = vadd.f32 %v1500, 0.5
    %v1502 = vmul.f32 %v1496, %v1327
    %v1503 = vmul.f32 %v1492, %v1497
    %v1504 = vadd.f32 %v1502, %v1503
    %v1505 = vtanh.pop %v1504
    %v1506 = vmul.f32 %v1501, %v1505
    %s1507 = scalar_lea.vmem [#allocation11], 40
    %1508 = vst [vmem:[%s1507] sm:$0xff] %v1506
    %s1509 = sadd.s32 %s624, 5
    %p1510 = scmp.eq.s32.totalorder %s1509, 7
    // Predicated region
    $region54: #{tpu_custom_call.1} parent=1 // pred_check
      %p1511 = pneg %p1510
    $region55: #{tpu_custom_call.1} parent=1 // pred_check_branch
      %1513 = sbr.rel (%p1511) target = $region57
    $region56: #{tpu_custom_call.1} parent=1 // pred_region
      %1514 = vst [vmem:[#allocation12] sm:$0xff] %v1504
    $region57: #{tpu_custom_call.1} parent=1 // pred_fallthru
      _
    %s1515 = scalar_lea.vmem [#allocation2], 192
    %v1516 = vld [vmem:[%s1515] sm:$0xff]
    %v1517 = vld [vmem:[%s1515 + $0x8] sm:$0xff]
    %v1518 = vld [vmem:[%s1515 + $0x10] sm:$0xff]
    %v1519 = vld [vmem:[%s1515 + $0x18] sm:$0xff]
    %1520 = vmatprep.subr.mxu0 %v390
    %1521 = vmatpush1.msra.mxu0 %v389
    %1522 = vmatprep.subr.mxu0 %v394
    %1523 = vmatpush1.msra.mxu0 %v393
    %1524 = vmatprep.subr.mxu0 %v398
    %1525 = vmatpush1.msra.mxu0 %v397
    %1526 = vmatprep.subr.mxu0 %v402
    %1527 = vmatpush1.msra.mxu0 %v401
    %1528 = vmatprep.subr.mxu0 %v406
    %1529 = vmatpush1.msra.mxu0 %v405
    %1530 = vmatprep.subr.mxu0 %v410
    %1531 = vmatpush1.msra.mxu0 %v409
    %1532 = vmatprep.subr.mxu0 %v414
    %1533 = vmatpush1.msra.mxu0 %v413
    %1534 = vmatprep.subr.mxu0 %v418
    %1535 = vmatpush1.msra.mxu0 %v417
    %1536 = vmatprep.subr.mxu0 %v422
    %1537 = vmatpush1.msra.mxu0 %v421
    %1538 = vmatprep.subr.mxu0 %v426
    %1539 = vmatpush1.msra.mxu0 %v425
    %1540 = vmatprep.subr.mxu0 %v430
    %1541 = vmatpush1.msra.mxu0 %v429
    %1542 = vmatprep.subr.mxu0 %v434
    %1543 = vmatpush1.msra.mxu0 %v433
    %1544 = vmatprep.subr.mxu0 %v438
    %1545 = vmatpush1.msra.mxu0 %v437
    %1546 = vmatprep.subr.mxu0 %v442
    %1547 = vmatpush1.msra.mxu0 %v441
    %1548 = vmatprep.subr.mxu0 %v446
    %1549 = vmatpush1.msra.mxu0 %v445
    %1550 = vmatprep.subr.mxu0 %v450
    %1551 = vmatpush1.msra.mxu0 %v449
    %1552 = vmatprep.subr.mxu0 0.0
    %1553 = vmatpush1.msra.mxu0 0.0
    %1554 = vmatprep.subr.mxu0 0.0
    %1555 = vmatpush1.msra.mxu0 0.0
    %1556 = vmatprep.subr.mxu0 0.0
    %1557 = vmatpush1.msra.mxu0 0.0
    %1558 = vmatprep.subr.mxu0 0.0
    %1559 = vmatpush1.msra.mxu0 0.0
    %1560 = vmatprep.subr.mxu0 0.0
    %1561 = vmatpush1.msra.mxu0 0.0
    %1562 = vmatprep.subr.mxu0 0.0
    %1563 = vmatpush1.msra.mxu0 0.0
    %1564 = vmatprep.subr.mxu0 0.0
    %1565 = vmatpush1.msra.mxu0 0.0
    %1566 = vmatprep.subr.mxu0 0.0
    %1567 = vmatpush1.msra.mxu0 0.0
    %1568 = vmatprep.subr.mxu0 0.0
    %1569 = vmatpush1.msra.mxu0 0.0
    %1570 = vmatprep.subr.mxu0 0.0
    %1571 = vmatpush1.msra.mxu0 0.0
    %1572 = vmatprep.subr.mxu0 0.0
    %1573 = vmatpush1.msra.mxu0 0.0
    %1574 = vmatprep.subr.mxu0 0.0
    %1575 = vmatpush1.msra.mxu0 0.0
    %1576 = vmatprep.subr.mxu0 0.0
    %1577 = vmatpush1.msra.mxu0 0.0
    %1578 = vmatprep.subr.mxu0 0.0
    %1579 = vmatpush1.msra.mxu0 0.0
    %1580 = vmatprep.subr.mxu0 0.0
    %1581 = vmatpush1.msra.mxu0 0.0
    %1582 = vmatprep.subr.mxu0 0.0
    %1583 = vmatpush1.msra.mxu0 0.0
    %1584 = vmatprep.mubr.f32.mxu0 0.0
    %1585 = vmatmul.mubr.f32.gmra.mrb[0].mxu0 %v1506
    %v1586 = vpop.f32.mrb[0].mxu0
    %v1587 = vadd.f32 0.0, %v1586
    %v1588 = vpop.f32.mrb[0].mxu0
    %v1589 = vadd.f32 0.0, %v1588
    %1590 = vdwg.mxu0
    %1591 = vmatprep.subr.mxu0 %v392
    %1592 = vmatpush1.msra.mxu0 %v391
    %1593 = vmatprep.subr.mxu0 %v396
    %1594 = vmatpush1.msra.mxu0 %v395
    %1595 = vmatprep.subr.mxu0 %v400
    %1596 = vmatpush1.msra.mxu0 %v399
    %1597 = vmatprep.subr.mxu0 %v404
    %1598 = vmatpush1.msra.mxu0 %v403
    %1599 = vmatprep.subr.mxu0 %v408
    %1600 = vmatpush1.msra.mxu0 %v407
    %1601 = vmatprep.subr.mxu0 %v412
    %1602 = vmatpush1.msra.mxu0 %v411
    %1603 = vmatprep.subr.mxu0 %v416
    %1604 = vmatpush1.msra.mxu0 %v415
    %1605 = vmatprep.subr.mxu0 %v420
    %1606 = vmatpush1.msra.mxu0 %v419
    %1607 = vmatprep.subr.mxu0 %v424
    %1608 = vmatpush1.msra.mxu0 %v423
    %1609 = vmatprep.subr.mxu0 %v428
    %1610 = vmatpush1.msra.mxu0 %v427
    %1611 = vmatprep.subr.mxu0 %v432
    %1612 = vmatpush1.msra.mxu0 %v431
    %1613 = vmatprep.subr.mxu0 %v436
    %1614 = vmatpush1.msra.mxu0 %v435
    %1615 = vmatprep.subr.mxu0 %v440
    %1616 = vmatpush1.msra.mxu0 %v439
    %1617 = vmatprep.subr.mxu0 %v444
    %1618 = vmatpush1.msra.mxu0 %v443
    %1619 = vmatprep.subr.mxu0 %v448
    %1620 = vmatpush1.msra.mxu0 %v447
    %1621 = vmatprep.subr.mxu0 %v452
    %1622 = vmatpush1.msra.mxu0 %v451
    %1623 = vmatprep.subr.mxu0 0.0
    %1624 = vmatpush1.msra.mxu0 0.0
    %1625 = vmatprep.subr.mxu0 0.0
    %1626 = vmatpush1.msra.mxu0 0.0
    %1627 = vmatprep.subr.mxu0 0.0
    %1628 = vmatpush1.msra.mxu0 0.0
    %1629 = vmatprep.subr.mxu0 0.0
    %1630 = vmatpush1.msra.mxu0 0.0
    %1631 = vmatprep.subr.mxu0 0.0
    %1632 = vmatpush1.msra.mxu0 0.0
    %1633 = vmatprep.subr.mxu0 0.0
    %1634 = vmatpush1.msra.mxu0 0.0
    %1635 = vmatprep.subr.mxu0 0.0
    %1636 = vmatpush1.msra.mxu0 0.0
    %1637 = vmatprep.subr.mxu0 0.0
    %1638 = vmatpush1.msra.mxu0 0.0
    %1639 = vmatprep.subr.mxu0 0.0
    %1640 = vmatpush1.msra.mxu0 0.0
    %1641 = vmatprep.subr.mxu0 0.0
    %1642 = vmatpush1.msra.mxu0 0.0
    %1643 = vmatprep.subr.mxu0 0.0
    %1644 = vmatpush1.msra.mxu0 0.0
    %1645 = vmatprep.subr.mxu0 0.0
    %1646 = vmatpush1.msra.mxu0 0.0
    %1647 = vmatprep.subr.mxu0 0.0
    %1648 = vmatpush1.msra.mxu0 0.0
    %1649 = vmatprep.subr.mxu0 0.0
    %1650 = vmatpush1.msra.mxu0 0.0
    %1651 = vmatprep.subr.mxu0 0.0
    %1652 = vmatpush1.msra.mxu0 0.0
    %1653 = vmatprep.subr.mxu0 0.0
    %1654 = vmatpush1.msra.mxu0 0.0
    %1655 = vmatprep.mubr.f32.mxu0 0.0
    %1656 = vmatmul.mubr.f32.gmra.mrb[0].mxu0 %v1506
    %v1657 = vpop.f32.mrb[0].mxu0
    %v1658 = vadd.f32 0.0, %v1657
    %v1659 = vpop.f32.mrb[0].mxu0
    %v1660 = vadd.f32 0.0, %v1659
    %1661 = vdwg.mxu0
    %v1662 = vadd.f32 %v1516, %v1587
    %v1663 = vadd.f32 %v1517, %v1589
    %v1664 = vadd.f32 %v1518, %v1658
    %v1665 = vadd.f32 %v1519, %v1660
    %v1666 = vmul.f32 %v1662, 0.5
    %v1667 = vtanh.pop %v1666
    %v1668 = vmul.f32 %v1667, 0.5
    %v1669 = vadd.f32 %v1668, 0.5
    %v1670 = vmul.f32 %v1663, 0.5
    %v1671 = vtanh.pop %v1670
    %v1672 = vmul.f32 %v1671, 0.5
    %v1673 = vadd.f32 %v1672, 0.5
    %v1674 = vtanh.pop %v1664
    %v1675 = vmul.f32 %v1665, 0.5
    %v1676 = vtanh.pop %v1675
    %v1677 = vmul.f32 %v1676, 0.5
    %v1678 = vadd.f32 %v1677, 0.5
    %v1679 = vmul.f32 %v1673, %v1504
    %v1680 = vmul.f32 %v1669, %v1674
    %v1681 = vadd.f32 %v1679, %v1680
    %v1682 = vtanh.pop %v1681
    %v1683 = vmul.f32 %v1678, %v1682
    %s1684 = scalar_lea.vmem [#allocation11], 48
    %1685 = vst [vmem:[%s1684] sm:$0xff] %v1683
    %s1686 = sadd.s32 %s624, 6
    %p1687 = scmp.eq.s32.totalorder %s1686, 7
    // Predicated region
    $region58: #{tpu_custom_call.1} parent=1 // pred_check
      %p1688 = pneg %p1687
    $region59: #{tpu_custom_call.1} parent=1 // pred_check_branch
      %1690 = sbr.rel (%p1688) target = $region61
    $region60: #{tpu_custom_call.1} parent=1 // pred_region
      %1691 = vst [vmem:[#allocation12] sm:$0xff] %v1681
    $region61: #{tpu_custom_call.1} parent=1 // pred_fallthru
      _
    %s1692 = scalar_lea.vmem [#allocation2], 224
    %v1693 = vld [vmem:[%s1692] sm:$0xff]
    %v1694 = vld [vmem:[%s1692 + $0x8] sm:$0xff]
    %v1695 = vld [vmem:[%s1692 + $0x10] sm:$0xff]
    %v1696 = vld [vmem:[%s1692 + $0x18] sm:$0xff]
    %1697 = vmatprep.subr.mxu0 %v390
    %1698 = vmatpush1.msra.mxu0 %v389
    %1699 = vmatprep.subr.mxu0 %v394
    %1700 = vmatpush1.msra.mxu0 %v393
    %1701 = vmatprep.subr.mxu0 %v398
    %1702 = vmatpush1.msra.mxu0 %v397
    %1703 = vmatprep.subr.mxu0 %v402
    %1704 = vmatpush1.msra.mxu0 %v401
    %1705 = vmatprep.subr.mxu0 %v406
    %1706 = vmatpush1.msra.mxu0 %v405
    %1707 = vmatprep.subr.mxu0 %v410
    %1708 = vmatpush1.msra.mxu0 %v409
    %1709 = vmatprep.subr.mxu0 %v414
    %1710 = vmatpush1.msra.mxu0 %v413
    %1711 = vmatprep.subr.mxu0 %v418
    %1712 = vmatpush1.msra.mxu0 %v417
    %1713 = vmatprep.subr.mxu0 %v422
    %1714 = vmatpush1.msra.mxu0 %v421
    %1715 = vmatprep.subr.mxu0 %v426
    %1716 = vmatpush1.msra.mxu0 %v425
    %1717 = vmatprep.subr.mxu0 %v430
    %1718 = vmatpush1.msra.mxu0 %v429
    %1719 = vmatprep.subr.mxu0 %v434
    %1720 = vmatpush1.msra.mxu0 %v433
    %1721 = vmatprep.subr.mxu0 %v438
    %1722 = vmatpush1.msra.mxu0 %v437
    %1723 = vmatprep.subr.mxu0 %v442
    %1724 = vmatpush1.msra.mxu0 %v441
    %1725 = vmatprep.subr.mxu0 %v446
    %1726 = vmatpush1.msra.mxu0 %v445
    %1727 = vmatprep.subr.mxu0 %v450
    %1728 = vmatpush1.msra.mxu0 %v449
    %1729 = vmatprep.subr.mxu0 0.0
    %1730 = vmatpush1.msra.mxu0 0.0
    %1731 = vmatprep.subr.mxu0 0.0
    %1732 = vmatpush1.msra.mxu0 0.0
    %1733 = vmatprep.subr.mxu0 0.0
    %1734 = vmatpush1.msra.mxu0 0.0
    %1735 = vmatprep.subr.mxu0 0.0
    %1736 = vmatpush1.msra.mxu0 0.0
    %1737 = vmatprep.subr.mxu0 0.0
    %1738 = vmatpush1.msra.mxu0 0.0
    %1739 = vmatprep.subr.mxu0 0.0
    %1740 = vmatpush1.msra.mxu0 0.0
    %1741 = vmatprep.subr.mxu0 0.0
    %1742 = vmatpush1.msra.mxu0 0.0
    %1743 = vmatprep.subr.mxu0 0.0
    %1744 = vmatpush1.msra.mxu0 0.0
    %1745 = vmatprep.subr.mxu0 0.0
    %1746 = vmatpush1.msra.mxu0 0.0
    %1747 = vmatprep.subr.mxu0 0.0
    %1748 = vmatpush1.msra.mxu0 0.0
    %1749 = vmatprep.subr.mxu0 0.0
    %1750 = vmatpush1.msra.mxu0 0.0
    %1751 = vmatprep.subr.mxu0 0.0
    %1752 = vmatpush1.msra.mxu0 0.0
    %1753 = vmatprep.subr.mxu0 0.0
    %1754 = vmatpush1.msra.mxu0 0.0
    %1755 = vmatprep.subr.mxu0 0.0
    %1756 = vmatpush1.msra.mxu0 0.0
    %1757 = vmatprep.subr.mxu0 0.0
    %1758 = vmatpush1.msra.mxu0 0.0
    %1759 = vmatprep.subr.mxu0 0.0
    %1760 = vmatpush1.msra.mxu0 0.0
    %1761 = vmatprep.mubr.f32.mxu0 0.0
    %1762 = vmatmul.mubr.f32.gmra.mrb[0].mxu0 %v1683
    %v1763 = vpop.f32.mrb[0].mxu0
    %v1764 = vadd.f32 0.0, %v1763
    %v1765 = vpop.f32.mrb[0].mxu0
    %v1766 = vadd.f32 0.0, %v1765
    %1767 = vdwg.mxu0
    %1768 = vmatprep.subr.mxu0 %v392
    %1769 = vmatpush1.msra.mxu0 %v391
    %1770 = vmatprep.subr.mxu0 %v396
    %1771 = vmatpush1.msra.mxu0 %v395
    %1772 = vmatprep.subr.mxu0 %v400
    %1773 = vmatpush1.msra.mxu0 %v399
    %1774 = vmatprep.subr.mxu0 %v404
    %1775 = vmatpush1.msra.mxu0 %v403
    %1776 = vmatprep.subr.mxu0 %v408
    %1777 = vmatpush1.msra.mxu0 %v407
    %1778 = vmatprep.subr.mxu0 %v412
    %1779 = vmatpush1.msra.mxu0 %v411
    %1780 = vmatprep.subr.mxu0 %v416
    %1781 = vmatpush1.msra.mxu0 %v415
    %1782 = vmatprep.subr.mxu0 %v420
    %1783 = vmatpush1.msra.mxu0 %v419
    %1784 = vmatprep.subr.mxu0 %v424
    %1785 = vmatpush1.msra.mxu0 %v423
    %1786 = vmatprep.subr.mxu0 %v428
    %1787 = vmatpush1.msra.mxu0 %v427
    %1788 = vmatprep.subr.mxu0 %v432
    %1789 = vmatpush1.msra.mxu0 %v431
    %1790 = vmatprep.subr.mxu0 %v436
    %1791 = vmatpush1.msra.mxu0 %v435
    %1792 = vmatprep.subr.mxu0 %v440
    %1793 = vmatpush1.msra.mxu0 %v439
    %1794 = vmatprep.subr.mxu0 %v444
    %1795 = vmatpush1.msra.mxu0 %v443
    %1796 = vmatprep.subr.mxu0 %v448
    %1797 = vmatpush1.msra.mxu0 %v447
    %1798 = vmatprep.subr.mxu0 %v452
    %1799 = vmatpush1.msra.mxu0 %v451
    %1800 = vmatprep.subr.mxu0 0.0
    %1801 = vmatpush1.msra.mxu0 0.0
    %1802 = vmatprep.subr.mxu0 0.0
    %1803 = vmatpush1.msra.mxu0 0.0
    %1804 = vmatprep.subr.mxu0 0.0
    %1805 = vmatpush1.msra.mxu0 0.0
    %1806 = vmatprep.subr.mxu0 0.0
    %1807 = vmatpush1.msra.mxu0 0.0
    %1808 = vmatprep.subr.mxu0 0.0
    %1809 = vmatpush1.msra.mxu0 0.0
    %1810 = vmatprep.subr.mxu0 0.0
    %1811 = vmatpush1.msra.mxu0 0.0
    %1812 = vmatprep.subr.mxu0 0.0
    %1813 = vmatpush1.msra.mxu0 0.0
    %1814 = vmatprep.subr.mxu0 0.0
    %1815 = vmatpush1.msra.mxu0 0.0
    %1816 = vmatprep.subr.mxu0 0.0
    %1817 = vmatpush1.msra.mxu0 0.0
    %1818 = vmatprep.subr.mxu0 0.0
    %1819 = vmatpush1.msra.mxu0 0.0
    %1820 = vmatprep.subr.mxu0 0.0
    %1821 = vmatpush1.msra.mxu0 0.0
    %1822 = vmatprep.subr.mxu0 0.0
    %1823 = vmatpush1.msra.mxu0 0.0
    %1824 = vmatprep.subr.mxu0 0.0
    %1825 = vmatpush1.msra.mxu0 0.0
    %1826 = vmatprep.subr.mxu0 0.0
    %1827 = vmatpush1.msra.mxu0 0.0
    %1828 = vmatprep.subr.mxu0 0.0
    %1829 = vmatpush1.msra.mxu0 0.0
    %1830 = vmatprep.subr.mxu0 0.0
    %1831 = vmatpush1.msra.mxu0 0.0
    %1832 = vmatprep.mubr.f32.mxu0 0.0
    %1833 = vmatmul.mubr.f32.gmra.mrb[0].mxu0 %v1683
    %v1834 = vpop.f32.mrb[0].mxu0
    %v1835 = vadd.f32 0.0, %v1834
    %v1836 = vpop.f32.mrb[0].mxu0
    %v1837 = vadd.f32 0.0, %v1836
    %1838 = vdwg.mxu0
    %v1839 = vadd.f32 %v1693, %v1764
    %v1840 = vadd.f32 %v1694, %v1766
    %v1841 = vadd.f32 %v1695, %v1835
    %v1842 = vadd.f32 %v1696, %v1837
    %v1843 = vmul.f32 %v1839, 0.5
    %v1844 = vtanh.pop %v1843
    %v1845 = vmul.f32 %v1844, 0.5
    %v1846 = vadd.f32 %v1845, 0.5
    %v1847 = vmul.f32 %v1840, 0.5
    %v1848 = vtanh.pop %v1847
    %v1849 = vmul.f32 %v1848, 0.5
    %v1850 = vadd.f32 %v1849, 0.5
    %v1851 = vtanh.pop %v1841
    %v1852 = vmul.f32 %v1842, 0.5
    %v1853 = vtanh.pop %v1852
    %v1854 = vmul.f32 %v1853, 0.5
    %v1855 = vadd.f32 %v1854, 0.5
    %v1856 = vmul.f32 %v1850, %v1681
    %v1857 = vmul.f32 %v1846, %v1851
    %v1858 = vadd.f32 %v1856, %v1857
    %v1859 = vtanh.pop %v1858
    %v1860 = vmul.f32 %v1855, %v1859
    %s1861 = scalar_lea.vmem [#allocation11], 56
    %1862 = vst [vmem:[%s1861] sm:$0xff] %v1860
    %s1863 = sadd.s32 %s624, 7
    %p1864 = scmp.eq.s32.totalorder %s1863, 7
    // Predicated region
    $region62: #{tpu_custom_call.1} parent=1 // pred_check
      %p1865 = pneg %p1864
    $region63: #{tpu_custom_call.1} parent=1 // pred_check_branch
      %1867 = sbr.rel (%p1865) target = $region65
    $region64: #{tpu_custom_call.1} parent=1 // pred_region
      %1868 = vst [vmem:[#allocation12] sm:$0xff] %v1858
    $region65: #{tpu_custom_call.1} parent=1 // pred_fallthru
      _
    %1869 = vst [vmem:[#allocation3] sm:$0xff] %v1860
    %1870 = vst [vmem:[#allocation4] sm:$0xff] %v1858
    // Predicated region
    $region66: #{tpu_custom_call.1} parent=1 // pred_check
      _
    $region67: #{tpu_custom_call.1} parent=1 // pred_check_branch
      %1872 = sbr.rel (0) target = $region69
    $region68: #{tpu_custom_call.1} parent=1 // pred_region
      %s1874 = ssub.s32 1024, 1024
      %1875 = vsyncadd [#allocation7], %s1874
      %s1876 = sshll.u32 [#allocation11], 4
      %s1877 = int_to_ptr.vmem [resolvable:$true] %s1876
      %1882 = dma.vmem_to_hbm [thread:$0]  %s1877, 1024, %s4, [#allocation7], 128, 128, 8
    $region69: #{tpu_custom_call.1} parent=1 // pred_fallthru
      _
    // Predicated region
    $region70: #{tpu_custom_call.1} parent=1 // pred_check
      _
    $region71: #{tpu_custom_call.1} parent=1 // pred_check_branch
      %1884 = sbr.rel (0) target = $region73
    $region72: #{tpu_custom_call.1} parent=1 // pred_region
      %s1886 = ssub.s32 128, 128
      %1887 = vsyncadd [#allocation13], %s1886
      %s1889 = sshll.u32 [#allocation12], 4
      %s1890 = int_to_ptr.vmem [resolvable:$true] %s1889
      %1892 = dma.vmem_to_hbm [thread:$0]  %s1890, 128, %s5, [#allocation13]
    $region73: #{tpu_custom_call.1} parent=1 // pred_fallthru
      _
    // Predicated region
    $region74: #{tpu_custom_call.1} parent=1 // pred_check
      _
    $region75: #{tpu_custom_call.1} parent=1 // pred_check_branch
      %1894 = sbr.rel (0) target = $region77
    $region76: #{tpu_custom_call.1} parent=1 // pred_region
      %1895 = dma.done [#allocation7], 1024
    $region77: #{tpu_custom_call.1} parent=1 // pred_fallthru
      _
    // Predicated region
    $region78: #{tpu_custom_call.1} parent=1 // pred_check
      _
    $region79: #{tpu_custom_call.1} parent=1 // pred_check_branch
      %1897 = sbr.rel (0) target = $region81
    $region80: #{tpu_custom_call.1} parent=1 // pred_region
      %1898 = dma.done [#allocation13], 128
    $region81: #{tpu_custom_call.1} parent=1 // pred_fallthru
      _
    %1899 = vsyncpa [#allocation6], 1
    %1900 = vsyncpa [#allocation9], 1
    %1901 = vsyncpa [#allocation7], 1
    %1902 = vsyncpa [#allocation13], 1

</llo_original>
